<compile_context>
chip_gen: v7x
topology: tpu7x:2x2x1
jax: 0.10.0
libtpu: 0.0.40
codegen_flags: <defaults>
</compile_context>

<pallas_src>
import jax
import jax.numpy as jnp
from jax.experimental import pallas as pl
from jax.experimental.pallas import tpu as pltpu


HEADS = 4


def _self_attention_kernel(x_ref, wqkv_ref, wu_ref, mask_ref, sel_ref, bu_ref, o_ref):
    bt, t, k = x_ref.shape            # (batch_tile, tokens, embed)
    n, _, s = wqkv_ref.shape          # (3*heads, embed, head_dim)
    h = n // 3
    r = bt * t                        # rows handled per grid step
    m = t * k                         # lane-dense output width per batch element
    f32, bf16 = jnp.float32, jnp.bfloat16

    # ---- Q/K/V projections: one batched einsum over 3h weight-stacked heads ----
    # (x is replicated along the major batch dim only; no minor-dim transposes.)
    x2d = x_ref[...].reshape(r, k)                        # (r, k) bf16
    xh = jnp.broadcast_to(x2d, (n, r, k))                 # major-dim replication only
    qkv = jnp.einsum("nrk,nks->nrs", xh, wqkv_ref[...],
                     preferred_element_type=f32)          # bf16 in, f32 accumulate

    def regroup(a):
        # (h, bt*t, s) -> (h*bt, t, s): pure major/sublane-aligned reshapes.
        return a.reshape(h, bt, t, s).reshape(h * bt, t, s).astype(bf16)

    q = regroup(qkv[0:h])             # Wq was pre-scaled by 1/sqrt(k) in the wrapper
    kk = regroup(qkv[h:2 * h])
    v = regroup(qkv[2 * h:3 * h])

    # ---- attention: one batched QK^T, one f32 softmax, one batched PV ----
    scores = jnp.einsum("bts,bus->btu", q, kk,
                        preferred_element_type=f32)       # (h*bt, t, t), pre-scaled
    # TODO(synk): causal mask branch (mask=True) not implemented; module default is mask=False.
    mx = jnp.max(scores, axis=-1, keepdims=True)
    e = jnp.exp(scores - mx)
    p = e * pl.reciprocal(jnp.sum(e, axis=-1, keepdims=True), approx=True)

    ctx = jnp.einsum("btu,bus->bts", p.astype(bf16), v,
                     preferred_element_type=f32)          # (h*bt, t, s)

    # ---- unifyheads + lane-dense (t*k)-wide store ----
    # wu_ref is the unify weight pre-tiled t times along its output dim, so this
    # batched matmul directly emits a (t*k)-wide slab per (head, row).
    ctx = ctx.reshape(h, bt, t, s).reshape(h, r, s).astype(bf16)
    z = jnp.einsum("hrs,hsm->hrm", ctx, wu_ref[...],
                   preferred_element_type=f32)            # (h, r, t*k)
    # The 0/1 mask keeps only the column block matching each row's token index;
    # the tiny selector matmul then sums heads and routes rows to their batch
    # element — i.e. "concat heads + reshape to (bt, t*k)" done on the MXU/VPU
    # instead of with a minor-dim reshape.
    z = z.reshape(h * r, m) * mask_ref[...]
    y = jnp.dot(sel_ref[...], z, preferred_element_type=f32) + bu_ref[...]   # (bt, t*k)
    o_ref[0] = y.astype(o_ref.dtype)


def self_attention(x, wq, wk, wv, wu, bu, *, heads=HEADS, batch_tile=None):
    b, t, k = x.shape
    h = heads
    assert k % h == 0
    s = k // h
    if batch_tile is None:
        # Keep the grid extent at (at least) 2 when possible so both v7x
        # TensorCores get work; fold the rest of the batch into the block.
        batch_tile = b // 2 if (b % 2 == 0 and b >= 2) else b
    bt = batch_tile
    assert b % bt == 0
    r = bt * t
    m = t * k
    f32, bf16 = jnp.float32, jnp.bfloat16

    # --- one-time parameter preprocessing (wrapper side, never per grid step) ---
    def per_head_in_out(w):
        # (out, in) -> (h, in, s); head hi owns output columns [hi*s, (hi+1)*s).
        return w.T.reshape(k, h, s).transpose(1, 0, 2)

    inv_scale = 1.0 / (k ** 0.5)      # PyTorch scales by 1/sqrt(k), not 1/sqrt(s)
    # Stack Q/K/V per-head weights along the batch dim; fold the score scale
    # into Wq (in f32, before the bf16 cast).
    wqkv = jnp.concatenate(
        [per_head_in_out(wq) * inv_scale, per_head_in_out(wk), per_head_in_out(wv)],
        axis=0).astype(bf16)                                              # (3h, k, s)
    # unifyheads weight per head, pre-tiled t times along the output so the
    # kernel's last batched matmul emits a lane-dense (t*k)-wide slab.
    wu_wide = jnp.tile(wu.T.reshape(h, s, k), (1, 1, t)).astype(bf16)     # (h, s, t*k)
    bu_wide = jnp.tile(bu.reshape(1, k), (1, t)).astype(f32)              # (1, t*k)

    # Constant relayout operands (precomputed; resident in VMEM across steps).
    rows = jnp.arange(h * r)
    mask = ((rows[:, None] % t) == (jnp.arange(m)[None, :] // k)).astype(f32)   # (h*r, t*k)
    sel = (((rows[None, :] // t) % bt) == jnp.arange(bt)[:, None]).astype(f32)  # (bt, h*r)

    x_bf = x.astype(bf16)

    out_wide = pl.pallas_call(
        _self_attention_kernel,
        out_shape=jax.ShapeDtypeStruct((b // bt, bt, m), f32),
        grid_spec=pltpu.PrefetchScalarGridSpec(
            num_scalar_prefetch=0,
            grid=(b // bt,),
            in_specs=[
                pl.BlockSpec((bt, t, k), lambda i: (i, 0, 0)),      # x (bf16)
                pl.BlockSpec((3 * h, k, s), lambda i: (0, 0, 0)),   # Wq|Wk|Wv per head
                pl.BlockSpec((h, s, m), lambda i: (0, 0, 0)),       # Wu, pre-tiled wide
                pl.BlockSpec((h * r, m), lambda i: (0, 0)),         # relayout mask
                pl.BlockSpec((bt, h * r), lambda i: (0, 0)),        # batch selector
                pl.BlockSpec((1, m), lambda i: (0, 0)),             # bias, pre-tiled wide
            ],
            out_specs=pl.BlockSpec((1, bt, m), lambda i: (i, 0, 0)),
        ),
        compiler_params=pltpu.CompilerParams(
            dimension_semantics=("parallel",),
        ),
    )(x_bf, wqkv, wu_wide, mask, sel, bu_wide)

    return out_wide.reshape(b, t, k).astype(x.dtype)


def self_attention_ref(x, wq, wk, wv, wu, bu, heads=HEADS):
    """Pure-JAX f32 reference mirroring the PyTorch forward."""
    b, t, k = x.shape
    h = heads
    s = k // h
    q = x @ wq.T
    kk = x @ wk.T
    v = x @ wv.T
    q = q.reshape(b, t, h, s).transpose(0, 2, 1, 3)
    kk = kk.reshape(b, t, h, s).transpose(0, 2, 1, 3)
    v = v.reshape(b, t, h, s).transpose(0, 2, 1, 3)
    dot = jnp.einsum("bhts,bhus->bhtu", q, kk) / (k ** 0.5)
    p = jax.nn.softmax(dot, axis=-1)
    out = jnp.einsum("bhtu,bhus->bhts", p, v)
    out = out.transpose(0, 2, 1, 3).reshape(b, t, k)
    return out @ wu.T + bu


if __name__ == "__main__":
    # Small shapes consistent with the module: b=2, t=8, k=32, heads=4.
    B, T, K = 2, 8, 32

    key = jax.random.PRNGKey(0)
    kx, kq, kk_, kv, ku, kb = jax.random.split(key, 6)

    x = jax.random.normal(kx, (B, T, K), dtype=jnp.float32)
    # Deterministic parameter init (PyTorch Linear weight shape: (out, in)).
    lim = 1.0 / (K ** 0.5)
    wq = jax.random.uniform(kq, (K, K), jnp.float32, -lim, lim)
    wk = jax.random.uniform(kk_, (K, K), jnp.float32, -lim, lim)
    wv = jax.random.uniform(kv, (K, K), jnp.float32, -lim, lim)
    wu = jax.random.uniform(ku, (K, K), jnp.float32, -lim, lim)
    bu = jax.random.uniform(kb, (K,), jnp.float32, -lim, lim)

    y = self_attention(x, wq, wk, wv, wu, bu)
    y = jax.block_until_ready(y)

    y_ref = self_attention_ref(x, wq, wk, wv, wu, bu)
    # bf16 MXU operands + approximate EUP reciprocal -> compare with bf16-level tolerance.
    assert jnp.allclose(y, y_ref, atol=2e-2, rtol=2e-2), "mismatch vs reference"

    print("KERNEL_OK")
</pallas_src>

<mosaic_0001>
module attributes {stable_mosaic.version = 11 : i64} {
  func.func @_self_attention_kernel(%arg0: i32, %arg1: memref<1x8x32xbf16, #tpu.memory_space<vmem>>, %arg2: memref<12x32x8xbf16, #tpu.memory_space<vmem>>, %arg3: memref<4x8x256xbf16, #tpu.memory_space<vmem>>, %arg4: memref<32x256xf32, #tpu.memory_space<vmem>>, %arg5: memref<1x32xf32, #tpu.memory_space<vmem>>, %arg6: memref<1x256xf32, #tpu.memory_space<vmem>>, %arg7: memref<1x1x256xf32, #tpu.memory_space<vmem>>) attributes {dimension_semantics = [#tpu.dimension_semantics<parallel>], iteration_bounds = array<i64: 2>, scalar_prefetch = 0 : i64, scratch_operands = 0 : i64, tpu.core_type = #tpu.core_type<tc>, window_params = [{transform_indices = @transform_0, window_bounds = array<i64: 1, 8, 32>}, {pipeline_mode = #tpu.pipeline_mode<synchronous>, transform_indices = @transform_1, window_bounds = array<i64: 12, 32, 8>}, {pipeline_mode = #tpu.pipeline_mode<synchronous>, transform_indices = @transform_2, window_bounds = array<i64: 4, 8, 256>}, {pipeline_mode = #tpu.pipeline_mode<synchronous>, transform_indices = @transform_3, window_bounds = array<i64: 32, 256>}, {pipeline_mode = #tpu.pipeline_mode<synchronous>, transform_indices = @transform_4, window_bounds = array<i64: 1, 32>}, {pipeline_mode = #tpu.pipeline_mode<synchronous>, transform_indices = @transform_5, window_bounds = array<i64: 1, 256>}, {transform_indices = @transform_6, window_bounds = array<i64: 1, 1, 256>}]} {
    %c0 = arith.constant 0 : index
    %c0_0 = arith.constant 0 : index
    %c0_1 = arith.constant 0 : index
    %0 = vector.load %arg1[%c0, %c0_0, %c0_1] : memref<1x8x32xbf16, #tpu.memory_space<vmem>>, vector<1x8x32xbf16>
    %1 = vector.shape_cast %0 : vector<1x8x32xbf16> to vector<8x32xbf16>
    %2 = vector.shape_cast %1 : vector<8x32xbf16> to vector<1x8x32xbf16>
    %3 = vector.broadcast %2 : vector<1x8x32xbf16> to vector<12x8x32xbf16>
    %c0_2 = arith.constant 0 : index
    %c0_3 = arith.constant 0 : index
    %c0_4 = arith.constant 0 : index
    %4 = vector.load %arg2[%c0_2, %c0_3, %c0_4] : memref<12x32x8xbf16, #tpu.memory_space<vmem>>, vector<12x32x8xbf16>
    "tpu.trace_start"() <{level = 10 : i32, message = "nrk,nks->nrs"}> : () -> ()
    %cst = arith.constant dense<0.000000e+00> : vector<12x8x8xf32>
    %5 = tpu.matmul %3, %4, %cst {dimension_numbers = #tpu.dot_dimension_numbers<[2], [1], [1], [2], [0, 0, 0, 1, 1, 2], [0], [0]>} : vector<12x8x32xbf16>, vector<12x32x8xbf16>, vector<12x8x8xf32> -> vector<12x8x8xf32>
    "tpu.trace_stop"() : () -> ()
    %6 = vector.extract_strided_slice %5 {offsets = [0, 0, 0], sizes = [4, 8, 8], strides = [1, 1, 1]} : vector<12x8x8xf32> to vector<4x8x8xf32>
    %7 = vector.shape_cast %6 : vector<4x8x8xf32> to vector<4x1x8x8xf32>
    %8 = vector.shape_cast %7 : vector<4x1x8x8xf32> to vector<4x8x8xf32>
    %9 = arith.truncf %8 : vector<4x8x8xf32> to vector<4x8x8xbf16>
    %10 = vector.extract_strided_slice %5 {offsets = [4, 0, 0], sizes = [4, 8, 8], strides = [1, 1, 1]} : vector<12x8x8xf32> to vector<4x8x8xf32>
    %11 = vector.shape_cast %10 : vector<4x8x8xf32> to vector<4x1x8x8xf32>
    %12 = vector.shape_cast %11 : vector<4x1x8x8xf32> to vector<4x8x8xf32>
    %13 = arith.truncf %12 : vector<4x8x8xf32> to vector<4x8x8xbf16>
    %14 = vector.extract_strided_slice %5 {offsets = [8, 0, 0], sizes = [4, 8, 8], strides = [1, 1, 1]} : vector<12x8x8xf32> to vector<4x8x8xf32>
    %15 = vector.shape_cast %14 : vector<4x8x8xf32> to vector<4x1x8x8xf32>
    %16 = vector.shape_cast %15 : vector<4x1x8x8xf32> to vector<4x8x8xf32>
    %17 = arith.truncf %16 : vector<4x8x8xf32> to vector<4x8x8xbf16>
    "tpu.trace_start"() <{level = 10 : i32, message = "bts,bus->btu"}> : () -> ()
    %cst_5 = arith.constant dense<0.000000e+00> : vector<4x8x8xf32>
    %18 = tpu.matmul %9, %13, %cst_5 {dimension_numbers = #tpu.dot_dimension_numbers<[2], [2], [1], [1], [0, 0, 0, 1, 1, 1], [0], [0]>} : vector<4x8x8xbf16>, vector<4x8x8xbf16>, vector<4x8x8xf32> -> vector<4x8x8xf32>
    "tpu.trace_stop"() : () -> ()
    %cst_6 = arith.constant dense<0xFF800000> : vector<4x8xf32>
    %19 = vector.multi_reduction <maximumf>, %18, %cst_6 [2] : vector<4x8x8xf32> to vector<4x8xf32>
    %20 = vector.shape_cast %19 : vector<4x8xf32> to vector<4x8x1xf32>
    %21 = vector.broadcast %20 : vector<4x8x1xf32> to vector<4x8x8xf32>
    %22 = arith.subf %18, %21 : vector<4x8x8xf32>
    %23 = math.exp %22 : vector<4x8x8xf32>
    %cst_7 = arith.constant dense<0.000000e+00> : vector<4x8xf32>
    %24 = vector.multi_reduction <add>, %23, %cst_7 [2] : vector<4x8x8xf32> to vector<4x8xf32>
    %25 = vector.shape_cast %24 : vector<4x8xf32> to vector<4x8x1xf32>
    %26 = tpu.reciprocal %25 {approx = true} : vector<4x8x1xf32> -> vector<4x8x1xf32>
    %27 = vector.broadcast %26 : vector<4x8x1xf32> to vector<4x8x8xf32>
    %28 = arith.mulf %23, %27 : vector<4x8x8xf32>
    %29 = arith.truncf %28 : vector<4x8x8xf32> to vector<4x8x8xbf16>
    "tpu.trace_start"() <{level = 10 : i32, message = "btu,bus->bts"}> : () -> ()
    %cst_8 = arith.constant dense<0.000000e+00> : vector<4x8x8xf32>
    %30 = tpu.matmul %29, %17, %cst_8 {dimension_numbers = #tpu.dot_dimension_numbers<[2], [1], [1], [2], [0, 0, 0, 1, 1, 2], [0], [0]>} : vector<4x8x8xbf16>, vector<4x8x8xbf16>, vector<4x8x8xf32> -> vector<4x8x8xf32>
    "tpu.trace_stop"() : () -> ()
    %31 = vector.shape_cast %30 : vector<4x8x8xf32> to vector<4x1x8x8xf32>
    %32 = vector.shape_cast %31 : vector<4x1x8x8xf32> to vector<4x8x8xf32>
    %33 = arith.truncf %32 : vector<4x8x8xf32> to vector<4x8x8xbf16>
    %c0_9 = arith.constant 0 : index
    %c0_10 = arith.constant 0 : index
    %c0_11 = arith.constant 0 : index
    %34 = vector.load %arg3[%c0_9, %c0_10, %c0_11] : memref<4x8x256xbf16, #tpu.memory_space<vmem>>, vector<4x8x256xbf16>
    "tpu.trace_start"() <{level = 10 : i32, message = "hrs,hsm->hrm"}> : () -> ()
    %cst_12 = arith.constant dense<0.000000e+00> : vector<4x8x256xf32>
    %35 = tpu.matmul %33, %34, %cst_12 {dimension_numbers = #tpu.dot_dimension_numbers<[2], [1], [1], [2], [0, 0, 0, 1, 1, 2], [0], [0]>} : vector<4x8x8xbf16>, vector<4x8x256xbf16>, vector<4x8x256xf32> -> vector<4x8x256xf32>
    "tpu.trace_stop"() : () -> ()
    %36 = vector.shape_cast %35 : vector<4x8x256xf32> to vector<32x256xf32>
    %c0_13 = arith.constant 0 : index
    %c0_14 = arith.constant 0 : index
    %37 = vector.load %arg4[%c0_13, %c0_14] : memref<32x256xf32, #tpu.memory_space<vmem>>, vector<32x256xf32>
    %38 = arith.mulf %36, %37 : vector<32x256xf32>
    %c0_15 = arith.constant 0 : index
    %c0_16 = arith.constant 0 : index
    %39 = vector.load %arg5[%c0_15, %c0_16] : memref<1x32xf32, #tpu.memory_space<vmem>>, vector<1x32xf32>
    %cst_17 = arith.constant dense<0.000000e+00> : vector<1x256xf32>
    %40 = tpu.matmul %39, %38, %cst_17 {dimension_numbers = #tpu.dot_dimension_numbers<[1], [0], [0], [1], [0, 0, 1, 1], [], []>} : vector<1x32xf32>, vector<32x256xf32>, vector<1x256xf32> -> vector<1x256xf32>
    %c0_18 = arith.constant 0 : index
    %c0_19 = arith.constant 0 : index
    %41 = vector.load %arg6[%c0_18, %c0_19] : memref<1x256xf32, #tpu.memory_space<vmem>>, vector<1x256xf32>
    %42 = arith.addf %40, %41 : vector<1x256xf32>
    %c0_20 = arith.constant 0 : index
    %c0_21 = arith.constant 0 : index
    %c0_22 = arith.constant 0 : index
    %43 = vector.load %arg7[%c0_20, %c0_21, %c0_22] : memref<1x1x256xf32, #tpu.memory_space<vmem>>, vector<1x1x256xf32>
    %44 = vector.shape_cast %43 : vector<1x1x256xf32> to vector<1x256xf32>
    %45 = vector.shape_cast %42 : vector<1x256xf32> to vector<1x1x256xf32>
    tpu.vector_store %arg7[%c0_20, %c0_21, %c0_22], %45 {strides = array<i32>} : memref<1x1x256xf32, #tpu.memory_space<vmem>>, vector<1x1x256xf32>,
    return
  }
  func.func @transform_0(%arg0: i32) -> (i32, i32, i32) {
    %c0_i32 = arith.constant 0 : i32
    %c0_i32_0 = arith.constant 0 : i32
    %c0_i32_1 = arith.constant 0 : i32
    return %arg0, %c0_i32, %c0_i32_0 : i32, i32, i32
  }
  func.func @transform_1(%arg0: i32) -> (i32, i32, i32) {
    %c0_i32 = arith.constant 0 : i32
    %c0_i32_0 = arith.constant 0 : i32
    %c0_i32_1 = arith.constant 0 : i32
    %c0_i32_2 = arith.constant 0 : i32
    return %c0_i32, %c0_i32_0, %c0_i32_1 : i32, i32, i32
  }
  func.func @transform_2(%arg0: i32) -> (i32, i32, i32) {
    %c0_i32 = arith.constant 0 : i32
    %c0_i32_0 = arith.constant 0 : i32
    %c0_i32_1 = arith.constant 0 : i32
    %c0_i32_2 = arith.constant 0 : i32
    return %c0_i32, %c0_i32_0, %c0_i32_1 : i32, i32, i32
  }
  func.func @transform_3(%arg0: i32) -> (i32, i32) {
    %c0_i32 = arith.constant 0 : i32
    %c0_i32_0 = arith.constant 0 : i32
    %c0_i32_1 = arith.constant 0 : i32
    return %c0_i32, %c0_i32_0 : i32, i32
  }
  func.func @transform_4(%arg0: i32) -> (i32, i32) {
    %c0_i32 = arith.constant 0 : i32
    %c0_i32_0 = arith.constant 0 : i32
    %c0_i32_1 = arith.constant 0 : i32
    return %c0_i32, %c0_i32_0 : i32, i32
  }
  func.func @transform_5(%arg0: i32) -> (i32, i32) {
    %c0_i32 = arith.constant 0 : i32
    %c0_i32_0 = arith.constant 0 : i32
    %c0_i32_1 = arith.constant 0 : i32
    return %c0_i32, %c0_i32_0 : i32, i32
  }
  func.func @transform_6(%arg0: i32) -> (i32, i32, i32) {
    %c0_i32 = arith.constant 0 : i32
    %c0_i32_0 = arith.constant 0 : i32
    %c0_i32_1 = arith.constant 0 : i32
    return %arg0, %c0_i32, %c0_i32_0 : i32, i32, i32
  }
}

</mosaic_0001>

<llo_original>
// kernel: tpu_custom_call.1
$region0: #{tpu_custom_call.1}
  #allocation0 [shape = 'u32[]', space=smem, size = 0x4, offset = 0x4, fixed_abs, tag = 'smem constant byte address 0x4 - core index']
  #allocation1 [shape = 'u32[144,128]{1,0:T(1,128)}', space=vmem, size = 0x12000, scoped, tag = 'internal scratch']
  %s0 = inlined_call_operand.vmem [shape: bf16[2,8,32], index: 0, kind: input, shape index: {}]
  %s1 = inlined_call_operand.vmem [shape: bf16[12,32,8], index: 1, kind: input, shape index: {}]
  %s2 = inlined_call_operand.vmem [shape: bf16[4,8,256], index: 2, kind: input, shape index: {}]
  %s3 = inlined_call_operand.vmem [shape: f32[32,256], index: 3, kind: input, shape index: {}]
  %s4 = inlined_call_operand.vmem [shape: f32[1,32], index: 4, kind: input, shape index: {}]
  %s5 = inlined_call_operand.vmem [shape: f32[1,256], index: 5, kind: input, shape index: {}]
  %s6 = inlined_call_operand.hbm [shape: f32[2,1,256], index: 6, kind: output, shape index: {}]
  %s7 = sld [smem:[#allocation0]]
  $region57: #{tpu_custom_call.1} parent=0
    _
  %s9 = ssub.s32 1, %s7
  %s10 = scalar_select 0, %s9, %s7
  $region1: #{tpu_custom_call.1} parent=0
    #allocation2 [shape = 'u8[2048]{0}', space=vmem, size = 0x800, scoped, tag = 'output window, operand 0']
    #allocation3 [shape = 's32[2]{0}', space=sflag, size = 0x8, scoped, tag = 'scoped memory for tpu_custom_call.1']
    %11 = vsyncpa [#allocation3], 0
    %s12 = scalar_lea.sflag [#allocation3], 1
    %13 = vsyncpa %s12, 0
    loop: start=0, step=1, limit=4
    $region2: #{tpu_custom_call.1} parent=1 // loop_pre_header
      _
    $region3: #{tpu_custom_call.1} parent=1 // loop_header
      %s15 = sphi 0, %s19
      %p16 = scmp.ge.s32.totalorder %s15, 4
      %s25 = sphi 0, %s27
      %s28 = sphi 0, %s25
      %s29 = sphi 0, %s28
      %s45 = sphi 0, %s29
      %s49 = sphi 0, %s49
      %s51 = sphi 0, %s49
      %s52 = sphi 0, %s51
      %s66 = sphi 0, %s52
      %s70 = sphi 0, %s70
      %s72 = sphi 0, %s70
      %s73 = sphi 0, %s72
      %s87 = sphi 0, %s73
      %s91 = sphi 0, %s91
      %s93 = sphi 0, %s91
      %s94 = sphi 0, %s93
      %s108 = sphi 0, %s94
      %s112 = sphi 0, %s112
      %s114 = sphi 0, %s112
      %s115 = sphi 0, %s114
      %s129 = sphi 0, %s115
      %s133 = sphi 0, %s133
      %s135 = sphi 0, %s133
      %s136 = sphi 0, %s135
      %s150 = sphi 0, %s136
      %s156 = sphi 0, %s158
      %s159 = sphi 0, %s156
      %s160 = sphi 0, %s159
      %s176 = sphi 0, %s160
    $region4: #{tpu_custom_call.1} parent=1 // loop_header_branch
      %18 = sbr.rel (%p16) target = $region8
    $region5: #{tpu_custom_call.1} parent=1 // loop_body
      %s20 = ssub.s32 %s15, 1
      %s21 = ssub.s32 %s15, 2
      %s22 = sadd.s32 %s15, 1
      %s23 = ssub.s32 %s15, %s22
      %p24 = scmp.eq.s32.totalorder %s23, 0
      %s26 = sadd.s32 %s25, 1
      %s27 = scalar_select %p24, %s25, %s26
      %p30 = pneg %p24
      %p31 = scmp.eq.s32.totalorder %s15, 1
      %p32 = por %p30, %p31
      %p33 = scmp.ne.s32.totalorder %s25, %s28
      %p34 = scmp.eq.s32.totalorder %s15, 0
      %p35 = por %p33, %p34
      %p36 = scmp.ne.s32.totalorder %s25, %s28
      %p37 = scmp.eq.s32.totalorder %s20, 1
      %p38 = por %p36, %p37
      %p39 = scmp.ne.s32.totalorder %s28, %s29
      %p40 = scmp.eq.s32.totalorder %s20, 0
      %p41 = por %p39, %p40
      %p42 = scmp.ne.s32.totalorder %s28, %s29
      %p43 = scmp.eq.s32.totalorder %s21, 1
      %p44 = por %p42, %p43
      %p46 = scmp.ne.s32.totalorder %s29, %s45
      %p47 = scmp.eq.s32.totalorder %s21, 0
      %p48 = por %p46, %p47
      %s50 = sadd.s32 %s49, 1
      %p53 = scmp.eq.s32.totalorder %s15, 1
      %p54 = scmp.ne.s32.totalorder %s49, %s51
      %p55 = scmp.eq.s32.totalorder %s15, 0
      %p56 = por %p54, %p55
      %p57 = scmp.ne.s32.totalorder %s49, %s51
      %p58 = scmp.eq.s32.totalorder %s20, 1
      %p59 = por %p57, %p58
      %p60 = scmp.ne.s32.totalorder %s51, %s52
      %p61 = scmp.eq.s32.totalorder %s20, 0
      %p62 = por %p60, %p61
      %p63 = scmp.ne.s32.totalorder %s51, %s52
      %p64 = scmp.eq.s32.totalorder %s21, 1
      %p65 = por %p63, %p64
      %p67 = scmp.ne.s32.totalorder %s52, %s66
      %p68 = scmp.eq.s32.totalorder %s21, 0
      %p69 = por %p67, %p68
      %s71 = sadd.s32 %s70, 1
      %p74 = scmp.eq.s32.totalorder %s15, 1
      %p75 = scmp.ne.s32.totalorder %s70, %s72
      %p76 = scmp.eq.s32.totalorder %s15, 0
      %p77 = por %p75, %p76
      %p78 = scmp.ne.s32.totalorder %s70, %s72
      %p79 = scmp.eq.s32.totalorder %s20, 1
      %p80 = por %p78, %p79
      %p81 = scmp.ne.s32.totalorder %s72, %s73
      %p82 = scmp.eq.s32.totalorder %s20, 0
      %p83 = por %p81, %p82
      %p84 = scmp.ne.s32.totalorder %s72, %s73
      %p85 = scmp.eq.s32.totalorder %s21, 1
      %p86 = por %p84, %p85
      %p88 = scmp.ne.s32.totalorder %s73, %s87
      %p89 = scmp.eq.s32.totalorder %s21, 0
      %p90 = por %p88, %p89
      %s92 = sadd.s32 %s91, 1
      %p95 = scmp.eq.s32.totalorder %s15, 1
      %p96 = scmp.ne.s32.totalorder %s91, %s93
      %p97 = scmp.eq.s32.totalorder %s15, 0
      %p98 = por %p96, %p97
      %p99 = scmp.ne.s32.totalorder %s91, %s93
      %p100 = scmp.eq.s32.totalorder %s20, 1
      %p101 = por %p99, %p100
      %p102 = scmp.ne.s32.totalorder %s93, %s94
      %p103 = scmp.eq.s32.totalorder %s20, 0
      %p104 = por %p102, %p103
      %p105 = scmp.ne.s32.totalorder %s93, %s94
      %p106 = scmp.eq.s32.totalorder %s21, 1
      %p107 = por %p105, %p106
      %p109 = scmp.ne.s32.totalorder %s94, %s108
      %p110 = scmp.eq.s32.totalorder %s21, 0
      %p111 = por %p109, %p110
      %s113 = sadd.s32 %s112, 1
      %p116 = scmp.eq.s32.totalorder %s15, 1
      %p117 = scmp.ne.s32.totalorder %s112, %s114
      %p118 = scmp.eq.s32.totalorder %s15, 0
      %p119 = por %p117, %p118
      %p120 = scmp.ne.s32.totalorder %s112, %s114
      %p121 = scmp.eq.s32.totalorder %s20, 1
      %p122 = por %p120, %p121
      %p123 = scmp.ne.s32.totalorder %s114, %s115
      %p124 = scmp.eq.s32.totalorder %s20, 0
      %p125 = por %p123, %p124
      %p126 = scmp.ne.s32.totalorder %s114, %s115
      %p127 = scmp.eq.s32.totalorder %s21, 1
      %p128 = por %p126, %p127
      %p130 = scmp.ne.s32.totalorder %s115, %s129
      %p131 = scmp.eq.s32.totalorder %s21, 0
      %p132 = por %p130, %p131
      %s134 = sadd.s32 %s133, 1
      %p137 = scmp.eq.s32.totalorder %s15, 1
      %p138 = scmp.ne.s32.totalorder %s133, %s135
      %p139 = scmp.eq.s32.totalorder %s15, 0
      %p140 = por %p138, %p139
      %p141 = scmp.ne.s32.totalorder %s133, %s135
      %p142 = scmp.eq.s32.totalorder %s20, 1
      %p143 = por %p141, %p142
      %p144 = scmp.ne.s32.totalorder %s135, %s136
      %p145 = scmp.eq.s32.totalorder %s20, 0
      %p146 = por %p144, %p145
      %p147 = scmp.ne.s32.totalorder %s135, %s136
      %p148 = scmp.eq.s32.totalorder %s21, 1
      %p149 = por %p147, %p148
      %p151 = scmp.ne.s32.totalorder %s136, %s150
      %p152 = scmp.eq.s32.totalorder %s21, 0
      %p153 = por %p151, %p152
      %s154 = ssub.s32 %s15, %s22
      %p155 = scmp.eq.s32.totalorder %s154, 0
      %s157 = sadd.s32 %s156, 1
      %s158 = scalar_select %p155, %s156, %s157
      %p161 = pneg %p155
      %p162 = scmp.eq.s32.totalorder %s15, 1
      %p163 = por %p161, %p162
      %p164 = scmp.ne.s32.totalorder %s156, %s159
      %p165 = scmp.eq.s32.totalorder %s15, 0
      %p166 = por %p164, %p165
      %p167 = scmp.ne.s32.totalorder %s156, %s159
      %p168 = scmp.eq.s32.totalorder %s20, 1
      %p169 = por %p167, %p168
      %p170 = scmp.ne.s32.totalorder %s159, %s160
      %p171 = scmp.eq.s32.totalorder %s20, 0
      %p172 = por %p170, %p171
      %p173 = scmp.ne.s32.totalorder %s159, %s160
      %p174 = scmp.eq.s32.totalorder %s21, 1
      %p175 = por %p173, %p174
      %p177 = scmp.ne.s32.totalorder %s160, %s176
      %p178 = scmp.eq.s32.totalorder %s21, 0
      %p179 = por %p177, %p178
      %p180 = scmp.le.s32.totalorder 1, %s15
      %p181 = scmp.lt.s32.totalorder %s15, 3
      %p182 = pnand %p180, %p181
      %p183 = pneg %p182
      // Predicated region
      $region9: #{tpu_custom_call.1} parent=5 // pred_check
        _
      $region10: #{tpu_custom_call.1} parent=5 // pred_check_branch
        %185 = sbr.rel (%p182) target = $region12
      $region11: #{tpu_custom_call.1} parent=5 // pred_region
        %s186 = ssub.s32 %s15, 1
        // Predicated region
        $region13: #{tpu_custom_call.1} parent=11 // pred_check
          %p187 = pneg %p62
        $region14: #{tpu_custom_call.1} parent=11 // pred_check_branch
          %189 = sbr.rel (%p187) target = $region16
        $region15: #{tpu_custom_call.1} parent=11 // pred_region
          _
        $region16: #{tpu_custom_call.1} parent=11 // pred_fallthru
          _
        // Predicated region
        $region17: #{tpu_custom_call.1} parent=11 // pred_check
          %p190 = pneg %p83
        $region18: #{tpu_custom_call.1} parent=11 // pred_check_branch
          %192 = sbr.rel (%p190) target = $region20
        $region19: #{tpu_custom_call.1} parent=11 // pred_region
          _
        $region20: #{tpu_custom_call.1} parent=11 // pred_fallthru
          _
        // Predicated region
        $region21: #{tpu_custom_call.1} parent=11 // pred_check
          %p193 = pneg %p104
        $region22: #{tpu_custom_call.1} parent=11 // pred_check_branch
          %195 = sbr.rel (%p193) target = $region24
        $region23: #{tpu_custom_call.1} parent=11 // pred_region
          _
        $region24: #{tpu_custom_call.1} parent=11 // pred_fallthru
          _
        // Predicated region
        $region25: #{tpu_custom_call.1} parent=11 // pred_check
          %p196 = pneg %p125
        $region26: #{tpu_custom_call.1} parent=11 // pred_check_branch
          %198 = sbr.rel (%p196) target = $region28
        $region27: #{tpu_custom_call.1} parent=11 // pred_region
          _
        $region28: #{tpu_custom_call.1} parent=11 // pred_fallthru
          _
        // Predicated region
        $region29: #{tpu_custom_call.1} parent=11 // pred_check
          %p199 = pneg %p146
        $region30: #{tpu_custom_call.1} parent=11 // pred_check_branch
          %201 = sbr.rel (%p199) target = $region32
        $region31: #{tpu_custom_call.1} parent=11 // pred_region
          _
        $region32: #{tpu_custom_call.1} parent=11 // pred_fallthru
          _
      $region12: #{tpu_custom_call.1} parent=5 // pred_fallthru
        _
      %p202 = scmp.lt.s32.totalorder %s15, 2
      // Predicated region
      $region33: #{tpu_custom_call.1} parent=5 // pred_check
        %p203 = pneg %p202
      $region34: #{tpu_custom_call.1} parent=5 // pred_check_branch
        %205 = sbr.rel (%p203) target = $region36
      $region35: #{tpu_custom_call.1} parent=5 // pred_region
        // Predicated region
        $region37: #{tpu_custom_call.1} parent=35 // pred_check
          %p206 = pneg %p35
        $region38: #{tpu_custom_call.1} parent=35 // pred_check_branch
          %208 = sbr.rel (%p206) target = $region40
        $region39: #{tpu_custom_call.1} parent=35 // pred_region
          %p209 = scmp.lt.s32.totalorder %s15, 1
          %s210 = scalar_select %p209, %s15, 1
          %s211 = smul.addr %s210, 4
          %s212 = scalar_lea.vmem %s0, %s211
        $region40: #{tpu_custom_call.1} parent=35 // pred_fallthru
          _
      $region36: #{tpu_custom_call.1} parent=5 // pred_fallthru
        _
      %p213 = scmp.le.s32.totalorder 1, %s15
      %p214 = scmp.lt.s32.totalorder %s15, 3
      %p215 = pnand %p213, %p214
      %p216 = pneg %p215
      // Predicated region
      $region41: #{tpu_custom_call.1} parent=5 // pred_check
        _
      $region42: #{tpu_custom_call.1} parent=5 // pred_check_branch
        %218 = sbr.rel (%p215) target = $region44
      $region43: #{tpu_custom_call.1} parent=5 // pred_region
        %s219 = ssub.s32 %s15, 1
        %p220 = scmp.lt.s32.totalorder %s20, 1
        %s221 = scalar_select %p220, %s20, 1
        %s222 = smul.addr %s221, 4
        %s223 = scalar_lea.vmem %s0, %s222
        %p224 = pneg %p41
        %p225 = pneg %p38
        %p226 = pneg %p62
        %p227 = pneg %p59
        %p228 = pneg %p83
        %p229 = pneg %p80
        %p230 = pneg %p104
        %p231 = pneg %p101
        %p232 = pneg %p125
        %p233 = pneg %p122
        %p234 = pneg %p146
        %p235 = pneg %p143
        %p236 = pneg %p172
        %p237 = pneg %p169
        %s238 = sand.u32 %s159, 1
        %s239 = scalar_lea.sflag [#allocation3], %s238
        %s240 = sand.u32 %s159, 1
        %s241 = smul.addr %s240, 2
        %s242 = scalar_lea.vmem [#allocation2], %s241
        %p243 = scmp.lt.s32.totalorder %s20, 1
        %s244 = scalar_select %p243, %s20, 1
        %s245 = smul.addr %s244, 4
        %s246 = scalar_lea.vmem %s0, %s245
        %v248 = vld [vmem:[%s246] sm:$0xf]
        %v249 = vld [vmem:[%s1] sm:$0xf]
        %v250 = vld [vmem:[%s1 + $0x4] sm:$0xf]
        %v251 = vld [vmem:[%s1 + $0x8] sm:$0xf]
        %v252 = vld [vmem:[%s1 + $0xc] sm:$0xf]
        %v253 = vld [vmem:[%s1 + $0x10] sm:$0xf]
        %v254 = vld [vmem:[%s1 + $0x14] sm:$0xf]
        %v255 = vld [vmem:[%s1 + $0x18] sm:$0xf]
        %v256 = vld [vmem:[%s1 + $0x1c] sm:$0xf]
        %v257 = vld [vmem:[%s1 + $0x20] sm:$0xf]
        %v258 = vld [vmem:[%s1 + $0x24] sm:$0xf]
        %v259 = vld [vmem:[%s1 + $0x28] sm:$0xf]
        %v260 = vld [vmem:[%s1 + $0x2c] sm:$0xf]
        %v261 = vld [vmem:[%s1 + $0x30] sm:$0xf]
        %v262 = vld [vmem:[%s1 + $0x34] sm:$0xf]
        %v263 = vld [vmem:[%s1 + $0x38] sm:$0xf]
        %v264 = vld [vmem:[%s1 + $0x3c] sm:$0xf]
        %v265 = vld [vmem:[%s1 + $0x40] sm:$0xf]
        %v266 = vld [vmem:[%s1 + $0x44] sm:$0xf]
        %v267 = vld [vmem:[%s1 + $0x48] sm:$0xf]
        %v268 = vld [vmem:[%s1 + $0x4c] sm:$0xf]
        %v269 = vld [vmem:[%s1 + $0x50] sm:$0xf]
        %v270 = vld [vmem:[%s1 + $0x54] sm:$0xf]
        %v271 = vld [vmem:[%s1 + $0x58] sm:$0xf]
        %v272 = vld [vmem:[%s1 + $0x5c] sm:$0xf]
        %v273 = vld [vmem:[%s1 + $0x60] sm:$0xf]
        %v274 = vld [vmem:[%s1 + $0x64] sm:$0xf]
        %v275 = vld [vmem:[%s1 + $0x68] sm:$0xf]
        %v276 = vld [vmem:[%s1 + $0x6c] sm:$0xf]
        %v277 = vld [vmem:[%s1 + $0x70] sm:$0xf]
        %v278 = vld [vmem:[%s1 + $0x74] sm:$0xf]
        %v279 = vld [vmem:[%s1 + $0x78] sm:$0xf]
        %v280 = vld [vmem:[%s1 + $0x7c] sm:$0xf]
        %v281 = vld [vmem:[%s1 + $0x80] sm:$0xf]
        %v282 = vld [vmem:[%s1 + $0x84] sm:$0xf]
        %v283 = vld [vmem:[%s1 + $0x88] sm:$0xf]
        %v284 = vld [vmem:[%s1 + $0x8c] sm:$0xf]
        %v285 = vld [vmem:[%s1 + $0x90] sm:$0xf]
        %v286 = vld [vmem:[%s1 + $0x94] sm:$0xf]
        %v287 = vld [vmem:[%s1 + $0x98] sm:$0xf]
        %v288 = vld [vmem:[%s1 + $0x9c] sm:$0xf]
        %v289 = vld [vmem:[%s1 + $0xa0] sm:$0xf]
        %v290 = vld [vmem:[%s1 + $0xa4] sm:$0xf]
        %v291 = vld [vmem:[%s1 + $0xa8] sm:$0xf]
        %v292 = vld [vmem:[%s1 + $0xac] sm:$0xf]
        %v293 = vld [vmem:[%s1 + $0xb0] sm:$0xf]
        %v294 = vld [vmem:[%s1 + $0xb4] sm:$0xf]
        %v295 = vld [vmem:[%s1 + $0xb8] sm:$0xf]
        %v296 = vld [vmem:[%s1 + $0xbc] sm:$0xf]
        %v301 = vunpack.c.l.b16 %v249
        %v302 = vunpack.c.l.b16 %v250
        %v303 = vunpack.c.l.b16 %v251
        %v304 = vunpack.c.l.b16 %v252
        %v305 = vpack.c.b16 %v302, %v301
        %v306 = vpack.c.b16 %v304, %v303
        %vm309 = vcmask 261120
        %v311 = vsel %vm309, %v248, 0
        %313 = vmatprep.subr.bf16.mxu0 0
        %314 = vmatpush1.bf16.msra.mxu0 %v305
        %315 = vmatprep.subr.bf16.mxu0 0
        %316 = vmatpush1.bf16.msra.mxu0 %v306
        %317 = vmatprep.subr.bf16.mxu0 0
        %318 = vmatpush1.bf16.msra.mxu0 0
        %319 = vmatprep.subr.bf16.mxu0 0
        %320 = vmatpush1.bf16.msra.mxu0 0
        %321 = vmatprep.subr.bf16.mxu0 0
        %322 = vmatpush1.bf16.msra.mxu0 0
        %323 = vmatprep.subr.bf16.mxu0 0
        %324 = vmatpush1.bf16.msra.mxu0 0
        %325 = vmatprep.subr.bf16.mxu0 0
        %326 = vmatpush1.bf16.msra.mxu0 0
        %327 = vmatprep.subr.bf16.mxu0 0
        %328 = vmatpush1.bf16.msra.mxu0 0
        %329 = vmatprep.subr.bf16.mxu0 0
        %330 = vmatpush1.bf16.msra.mxu0 0
        %331 = vmatprep.subr.bf16.mxu0 0
        %332 = vmatpush1.bf16.msra.mxu0 0
        %333 = vmatprep.subr.bf16.mxu0 0
        %334 = vmatpush1.bf16.msra.mxu0 0
        %335 = vmatprep.subr.bf16.mxu0 0
        %336 = vmatpush1.bf16.msra.mxu0 0
        %337 = vmatprep.subr.bf16.mxu0 0
        %338 = vmatpush1.bf16.msra.mxu0 0
        %339 = vmatprep.subr.bf16.mxu0 0
        %340 = vmatpush1.bf16.msra.mxu0 0
        %341 = vmatprep.subr.bf16.mxu0 0
        %342 = vmatpush1.bf16.msra.mxu0 0
        %343 = vmatprep.subr.bf16.mxu0 0
        %344 = vmatpush1.bf16.msra.mxu0 0
        %345 = vmatprep.mubr.bf16.mxu0 0
        %346 = vmatmul.mubr.bf16.gmra.mrb[0].mxu0 %v311
        %v347 = vpop.f32.mrb[0].mxu0
        %v348 = vadd.f32 0.0, %v347
        %v349 = vpop.f32.mrb[0].mxu0
        %v350 = vpop.f32.mrb[0].mxu0
        %v351 = vpop.f32.mrb[0].mxu0
        %352 = vdwg.mxu0
        %v357 = vunpack.c.l.b16 %v253
        %v358 = vunpack.c.l.b16 %v254
        %v359 = vunpack.c.l.b16 %v255
        %v360 = vunpack.c.l.b16 %v256
        %v361 = vpack.c.b16 %v358, %v357
        %v362 = vpack.c.b16 %v360, %v359
        %365 = vmatprep.subr.bf16.mxu0 0
        %366 = vmatpush1.bf16.msra.mxu0 %v361
        %367 = vmatprep.subr.bf16.mxu0 0
        %368 = vmatpush1.bf16.msra.mxu0 %v362
        %369 = vmatprep.subr.bf16.mxu0 0
        %370 = vmatpush1.bf16.msra.mxu0 0
        %371 = vmatprep.subr.bf16.mxu0 0
        %372 = vmatpush1.bf16.msra.mxu0 0
        %373 = vmatprep.subr.bf16.mxu0 0
        %374 = vmatpush1.bf16.msra.mxu0 0
        %375 = vmatprep.subr.bf16.mxu0 0
        %376 = vmatpush1.bf16.msra.mxu0 0
        %377 = vmatprep.subr.bf16.mxu0 0
        %378 = vmatpush1.bf16.msra.mxu0 0
        %379 = vmatprep.subr.bf16.mxu0 0
        %380 = vmatpush1.bf16.msra.mxu0 0
        %381 = vmatprep.subr.bf16.mxu0 0
        %382 = vmatpush1.bf16.msra.mxu0 0
        %383 = vmatprep.subr.bf16.mxu0 0
        %384 = vmatpush1.bf16.msra.mxu0 0
        %385 = vmatprep.subr.bf16.mxu0 0
        %386 = vmatpush1.bf16.msra.mxu0 0
        %387 = vmatprep.subr.bf16.mxu0 0
        %388 = vmatpush1.bf16.msra.mxu0 0
        %389 = vmatprep.subr.bf16.mxu0 0
        %390 = vmatpush1.bf16.msra.mxu0 0
        %391 = vmatprep.subr.bf16.mxu0 0
        %392 = vmatpush1.bf16.msra.mxu0 0
        %393 = vmatprep.subr.bf16.mxu0 0
        %394 = vmatpush1.bf16.msra.mxu0 0
        %395 = vmatprep.subr.bf16.mxu0 0
        %396 = vmatpush1.bf16.msra.mxu0 0
        %397 = vmatprep.mubr.bf16.mxu0 0
        %398 = vmatmul.mubr.bf16.gmra.mrb[0].mxu0 %v311
        %v399 = vpop.f32.mrb[0].mxu0
        %v400 = vadd.f32 0.0, %v399
        %v401 = vpop.f32.mrb[0].mxu0
        %v402 = vpop.f32.mrb[0].mxu0
        %v403 = vpop.f32.mrb[0].mxu0
        %404 = vdwg.mxu0
        %v409 = vunpack.c.l.b16 %v257
        %v410 = vunpack.c.l.b16 %v258
        %v411 = vunpack.c.l.b16 %v259
        %v412 = vunpack.c.l.b16 %v260
        %v413 = vpack.c.b16 %v410, %v409
        %v414 = vpack.c.b16 %v412, %v411
        %417 = vmatprep.subr.bf16.mxu0 0
        %418 = vmatpush1.bf16.msra.mxu0 %v413
        %419 = vmatprep.subr.bf16.mxu0 0
        %420 = vmatpush1.bf16.msra.mxu0 %v414
        %421 = vmatprep.subr.bf16.mxu0 0
        %422 = vmatpush1.bf16.msra.mxu0 0
        %423 = vmatprep.subr.bf16.mxu0 0
        %424 = vmatpush1.bf16.msra.mxu0 0
        %425 = vmatprep.subr.bf16.mxu0 0
        %426 = vmatpush1.bf16.msra.mxu0 0
        %427 = vmatprep.subr.bf16.mxu0 0
        %428 = vmatpush1.bf16.msra.mxu0 0
        %429 = vmatprep.subr.bf16.mxu0 0
        %430 = vmatpush1.bf16.msra.mxu0 0
        %431 = vmatprep.subr.bf16.mxu0 0
        %432 = vmatpush1.bf16.msra.mxu0 0
        %433 = vmatprep.subr.bf16.mxu0 0
        %434 = vmatpush1.bf16.msra.mxu0 0
        %435 = vmatprep.subr.bf16.mxu0 0
        %436 = vmatpush1.bf16.msra.mxu0 0
        %437 = vmatprep.subr.bf16.mxu0 0
        %438 = vmatpush1.bf16.msra.mxu0 0
        %439 = vmatprep.subr.bf16.mxu0 0
        %440 = vmatpush1.bf16.msra.mxu0 0
        %441 = vmatprep.subr.bf16.mxu0 0
        %442 = vmatpush1.bf16.msra.mxu0 0
        %443 = vmatprep.subr.bf16.mxu0 0
        %444 = vmatpush1.bf16.msra.mxu0 0
        %445 = vmatprep.subr.bf16.mxu0 0
        %446 = vmatpush1.bf16.msra.mxu0 0
        %447 = vmatprep.subr.bf16.mxu0 0
        %448 = vmatpush1.bf16.msra.mxu0 0
        %449 = vmatprep.mubr.bf16.mxu0 0
        %450 = vmatmul.mubr.bf16.gmra.mrb[0].mxu0 %v311
        %v451 = vpop.f32.mrb[0].mxu0
        %v452 = vadd.f32 0.0, %v451
        %v453 = vpop.f32.mrb[0].mxu0
        %v454 = vpop.f32.mrb[0].mxu0
        %v455 = vpop.f32.mrb[0].mxu0
        %456 = vdwg.mxu0
        %v461 = vunpack.c.l.b16 %v261
        %v462 = vunpack.c.l.b16 %v262
        %v463 = vunpack.c.l.b16 %v263
        %v464 = vunpack.c.l.b16 %v264
        %v465 = vpack.c.b16 %v462, %v461
        %v466 = vpack.c.b16 %v464, %v463
        %469 = vmatprep.subr.bf16.mxu0 0
        %470 = vmatpush1.bf16.msra.mxu0 %v465
        %471 = vmatprep.subr.bf16.mxu0 0
        %472 = vmatpush1.bf16.msra.mxu0 %v466
        %473 = vmatprep.subr.bf16.mxu0 0
        %474 = vmatpush1.bf16.msra.mxu0 0
        %475 = vmatprep.subr.bf16.mxu0 0
        %476 = vmatpush1.bf16.msra.mxu0 0
        %477 = vmatprep.subr.bf16.mxu0 0
        %478 = vmatpush1.bf16.msra.mxu0 0
        %479 = vmatprep.subr.bf16.mxu0 0
        %480 = vmatpush1.bf16.msra.mxu0 0
        %481 = vmatprep.subr.bf16.mxu0 0
        %482 = vmatpush1.bf16.msra.mxu0 0
        %483 = vmatprep.subr.bf16.mxu0 0
        %484 = vmatpush1.bf16.msra.mxu0 0
        %485 = vmatprep.subr.bf16.mxu0 0
        %486 = vmatpush1.bf16.msra.mxu0 0
        %487 = vmatprep.subr.bf16.mxu0 0
        %488 = vmatpush1.bf16.msra.mxu0 0
        %489 = vmatprep.subr.bf16.mxu0 0
        %490 = vmatpush1.bf16.msra.mxu0 0
        %491 = vmatprep.subr.bf16.mxu0 0
        %492 = vmatpush1.bf16.msra.mxu0 0
        %493 = vmatprep.subr.bf16.mxu0 0
        %494 = vmatpush1.bf16.msra.mxu0 0
        %495 = vmatprep.subr.bf16.mxu0 0
        %496 = vmatpush1.bf16.msra.mxu0 0
        %497 = vmatprep.subr.bf16.mxu0 0
        %498 = vmatpush1.bf16.msra.mxu0 0
        %499 = vmatprep.subr.bf16.mxu0 0
        %500 = vmatpush1.bf16.msra.mxu0 0
        %501 = vmatprep.mubr.bf16.mxu0 0
        %502 = vmatmul.mubr.bf16.gmra.mrb[0].mxu0 %v311
        %v503 = vpop.f32.mrb[0].mxu0
        %v504 = vadd.f32 0.0, %v503
        %v505 = vpop.f32.mrb[0].mxu0
        %v506 = vpop.f32.mrb[0].mxu0
        %v507 = vpop.f32.mrb[0].mxu0
        %508 = vdwg.mxu0
        %v513 = vunpack.c.l.b16 %v265
        %v514 = vunpack.c.l.b16 %v266
        %v515 = vunpack.c.l.b16 %v267
        %v516 = vunpack.c.l.b16 %v268
        %v517 = vpack.c.b16 %v514, %v513
        %v518 = vpack.c.b16 %v516, %v515
        %521 = vmatprep.subr.bf16.mxu0 0
        %522 = vmatpush1.bf16.msra.mxu0 %v517
        %523 = vmatprep.subr.bf16.mxu0 0
        %524 = vmatpush1.bf16.msra.mxu0 %v518
        %525 = vmatprep.subr.bf16.mxu0 0
        %526 = vmatpush1.bf16.msra.mxu0 0
        %527 = vmatprep.subr.bf16.mxu0 0
        %528 = vmatpush1.bf16.msra.mxu0 0
        %529 = vmatprep.subr.bf16.mxu0 0
        %530 = vmatpush1.bf16.msra.mxu0 0
        %531 = vmatprep.subr.bf16.mxu0 0
        %532 = vmatpush1.bf16.msra.mxu0 0
        %533 = vmatprep.subr.bf16.mxu0 0
        %534 = vmatpush1.bf16.msra.mxu0 0
        %535 = vmatprep.subr.bf16.mxu0 0
        %536 = vmatpush1.bf16.msra.mxu0 0
        %537 = vmatprep.subr.bf16.mxu0 0
        %538 = vmatpush1.bf16.msra.mxu0 0
        %539 = vmatprep.subr.bf16.mxu0 0
        %540 = vmatpush1.bf16.msra.mxu0 0
        %541 = vmatprep.subr.bf16.mxu0 0
        %542 = vmatpush1.bf16.msra.mxu0 0
        %543 = vmatprep.subr.bf16.mxu0 0
        %544 = vmatpush1.bf16.msra.mxu0 0
        %545 = vmatprep.subr.bf16.mxu0 0
        %546 = vmatpush1.bf16.msra.mxu0 0
        %547 = vmatprep.subr.bf16.mxu0 0
        %548 = vmatpush1.bf16.msra.mxu0 0
        %549 = vmatprep.subr.bf16.mxu0 0
        %550 = vmatpush1.bf16.msra.mxu0 0
        %551 = vmatprep.subr.bf16.mxu0 0
        %552 = vmatpush1.bf16.msra.mxu0 0
        %553 = vmatprep.mubr.bf16.mxu0 0
        %554 = vmatmul.mubr.bf16.gmra.mrb[0].mxu0 %v311
        %v555 = vpop.f32.mrb[0].mxu0
        %v556 = vadd.f32 0.0, %v555
        %v557 = vpop.f32.mrb[0].mxu0
        %v558 = vpop.f32.mrb[0].mxu0
        %v559 = vpop.f32.mrb[0].mxu0
        %560 = vdwg.mxu0
        %v565 = vunpack.c.l.b16 %v269
        %v566 = vunpack.c.l.b16 %v270
        %v567 = vunpack.c.l.b16 %v271
        %v568 = vunpack.c.l.b16 %v272
        %v569 = vpack.c.b16 %v566, %v565
        %v570 = vpack.c.b16 %v568, %v567
        %573 = vmatprep.subr.bf16.mxu0 0
        %574 = vmatpush1.bf16.msra.mxu0 %v569
        %575 = vmatprep.subr.bf16.mxu0 0
        %576 = vmatpush1.bf16.msra.mxu0 %v570
        %577 = vmatprep.subr.bf16.mxu0 0
        %578 = vmatpush1.bf16.msra.mxu0 0
        %579 = vmatprep.subr.bf16.mxu0 0
        %580 = vmatpush1.bf16.msra.mxu0 0
        %581 = vmatprep.subr.bf16.mxu0 0
        %582 = vmatpush1.bf16.msra.mxu0 0
        %583 = vmatprep.subr.bf16.mxu0 0
        %584 = vmatpush1.bf16.msra.mxu0 0
        %585 = vmatprep.subr.bf16.mxu0 0
        %586 = vmatpush1.bf16.msra.mxu0 0
        %587 = vmatprep.subr.bf16.mxu0 0
        %588 = vmatpush1.bf16.msra.mxu0 0
        %589 = vmatprep.subr.bf16.mxu0 0
        %590 = vmatpush1.bf16.msra.mxu0 0
        %591 = vmatprep.subr.bf16.mxu0 0
        %592 = vmatpush1.bf16.msra.mxu0 0
        %593 = vmatprep.subr.bf16.mxu0 0
        %594 = vmatpush1.bf16.msra.mxu0 0
        %595 = vmatprep.subr.bf16.mxu0 0
        %596 = vmatpush1.bf16.msra.mxu0 0
        %597 = vmatprep.subr.bf16.mxu0 0
        %598 = vmatpush1.bf16.msra.mxu0 0
        %599 = vmatprep.subr.bf16.mxu0 0
        %600 = vmatpush1.bf16.msra.mxu0 0
        %601 = vmatprep.subr.bf16.mxu0 0
        %602 = vmatpush1.bf16.msra.mxu0 0
        %603 = vmatprep.subr.bf16.mxu0 0
        %604 = vmatpush1.bf16.msra.mxu0 0
        %605 = vmatprep.mubr.bf16.mxu0 0
        %606 = vmatmul.mubr.bf16.gmra.mrb[0].mxu0 %v311
        %v607 = vpop.f32.mrb[0].mxu0
        %v608 = vadd.f32 0.0, %v607
        %v609 = vpop.f32.mrb[0].mxu0
        %v610 = vpop.f32.mrb[0].mxu0
        %v611 = vpop.f32.mrb[0].mxu0
        %612 = vdwg.mxu0
        %v617 = vunpack.c.l.b16 %v273
        %v618 = vunpack.c.l.b16 %v274
        %v619 = vunpack.c.l.b16 %v275
        %v620 = vunpack.c.l.b16 %v276
        %v621 = vpack.c.b16 %v618, %v617
        %v622 = vpack.c.b16 %v620, %v619
        %625 = vmatprep.subr.bf16.mxu0 0
        %626 = vmatpush1.bf16.msra.mxu0 %v621
        %627 = vmatprep.subr.bf16.mxu0 0
        %628 = vmatpush1.bf16.msra.mxu0 %v622
        %629 = vmatprep.subr.bf16.mxu0 0
        %630 = vmatpush1.bf16.msra.mxu0 0
        %631 = vmatprep.subr.bf16.mxu0 0
        %632 = vmatpush1.bf16.msra.mxu0 0
        %633 = vmatprep.subr.bf16.mxu0 0
        %634 = vmatpush1.bf16.msra.mxu0 0
        %635 = vmatprep.subr.bf16.mxu0 0
        %636 = vmatpush1.bf16.msra.mxu0 0
        %637 = vmatprep.subr.bf16.mxu0 0
        %638 = vmatpush1.bf16.msra.mxu0 0
        %639 = vmatprep.subr.bf16.mxu0 0
        %640 = vmatpush1.bf16.msra.mxu0 0
        %641 = vmatprep.subr.bf16.mxu0 0
        %642 = vmatpush1.bf16.msra.mxu0 0
        %643 = vmatprep.subr.bf16.mxu0 0
        %644 = vmatpush1.bf16.msra.mxu0 0
        %645 = vmatprep.subr.bf16.mxu0 0
        %646 = vmatpush1.bf16.msra.mxu0 0
        %647 = vmatprep.subr.bf16.mxu0 0
        %648 = vmatpush1.bf16.msra.mxu0 0
        %649 = vmatprep.subr.bf16.mxu0 0
        %650 = vmatpush1.bf16.msra.mxu0 0
        %651 = vmatprep.subr.bf16.mxu0 0
        %652 = vmatpush1.bf16.msra.mxu0 0
        %653 = vmatprep.subr.bf16.mxu0 0
        %654 = vmatpush1.bf16.msra.mxu0 0
        %655 = vmatprep.subr.bf16.mxu0 0
        %656 = vmatpush1.bf16.msra.mxu0 0
        %657 = vmatprep.mubr.bf16.mxu0 0
        %658 = vmatmul.mubr.bf16.gmra.mrb[0].mxu0 %v311
        %v659 = vpop.f32.mrb[0].mxu0
        %v660 = vadd.f32 0.0, %v659
        %v661 = vpop.f32.mrb[0].mxu0
        %v662 = vpop.f32.mrb[0].mxu0
        %v663 = vpop.f32.mrb[0].mxu0
        %664 = vdwg.mxu0
        %v669 = vunpack.c.l.b16 %v277
        %v670 = vunpack.c.l.b16 %v278
        %v671 = vunpack.c.l.b16 %v279
        %v672 = vunpack.c.l.b16 %v280
        %v673 = vpack.c.b16 %v670, %v669
        %v674 = vpack.c.b16 %v672, %v671
        %677 = vmatprep.subr.bf16.mxu0 0
        %678 = vmatpush1.bf16.msra.mxu0 %v673
        %679 = vmatprep.subr.bf16.mxu0 0
        %680 = vmatpush1.bf16.msra.mxu0 %v674
        %681 = vmatprep.subr.bf16.mxu0 0
        %682 = vmatpush1.bf16.msra.mxu0 0
        %683 = vmatprep.subr.bf16.mxu0 0
        %684 = vmatpush1.bf16.msra.mxu0 0
        %685 = vmatprep.subr.bf16.mxu0 0
        %686 = vmatpush1.bf16.msra.mxu0 0
        %687 = vmatprep.subr.bf16.mxu0 0
        %688 = vmatpush1.bf16.msra.mxu0 0
        %689 = vmatprep.subr.bf16.mxu0 0
        %690 = vmatpush1.bf16.msra.mxu0 0
        %691 = vmatprep.subr.bf16.mxu0 0
        %692 = vmatpush1.bf16.msra.mxu0 0
        %693 = vmatprep.subr.bf16.mxu0 0
        %694 = vmatpush1.bf16.msra.mxu0 0
        %695 = vmatprep.subr.bf16.mxu0 0
        %696 = vmatpush1.bf16.msra.mxu0 0
        %697 = vmatprep.subr.bf16.mxu0 0
        %698 = vmatpush1.bf16.msra.mxu0 0
        %699 = vmatprep.subr.bf16.mxu0 0
        %700 = vmatpush1.bf16.msra.mxu0 0
        %701 = vmatprep.subr.bf16.mxu0 0
        %702 = vmatpush1.bf16.msra.mxu0 0
        %703 = vmatprep.subr.bf16.mxu0 0
        %704 = vmatpush1.bf16.msra.mxu0 0
        %705 = vmatprep.subr.bf16.mxu0 0
        %706 = vmatpush1.bf16.msra.mxu0 0
        %707 = vmatprep.subr.bf16.mxu0 0
        %708 = vmatpush1.bf16.msra.mxu0 0
        %709 = vmatprep.mubr.bf16.mxu0 0
        %710 = vmatmul.mubr.bf16.gmra.mrb[0].mxu0 %v311
        %v711 = vpop.f32.mrb[0].mxu0
        %v712 = vadd.f32 0.0, %v711
        %v713 = vpop.f32.mrb[0].mxu0
        %v714 = vpop.f32.mrb[0].mxu0
        %v715 = vpop.f32.mrb[0].mxu0
        %716 = vdwg.mxu0
        %v721 = vunpack.c.l.b16 %v281
        %v722 = vunpack.c.l.b16 %v282
        %v723 = vunpack.c.l.b16 %v283
        %v724 = vunpack.c.l.b16 %v284
        %v725 = vpack.c.b16 %v722, %v721
        %v726 = vpack.c.b16 %v724, %v723
        %729 = vmatprep.subr.bf16.mxu0 0
        %730 = vmatpush1.bf16.msra.mxu0 %v725
        %731 = vmatprep.subr.bf16.mxu0 0
        %732 = vmatpush1.bf16.msra.mxu0 %v726
        %733 = vmatprep.subr.bf16.mxu0 0
        %734 = vmatpush1.bf16.msra.mxu0 0
        %735 = vmatprep.subr.bf16.mxu0 0
        %736 = vmatpush1.bf16.msra.mxu0 0
        %737 = vmatprep.subr.bf16.mxu0 0
        %738 = vmatpush1.bf16.msra.mxu0 0
        %739 = vmatprep.subr.bf16.mxu0 0
        %740 = vmatpush1.bf16.msra.mxu0 0
        %741 = vmatprep.subr.bf16.mxu0 0
        %742 = vmatpush1.bf16.msra.mxu0 0
        %743 = vmatprep.subr.bf16.mxu0 0
        %744 = vmatpush1.bf16.msra.mxu0 0
        %745 = vmatprep.subr.bf16.mxu0 0
        %746 = vmatpush1.bf16.msra.mxu0 0
        %747 = vmatprep.subr.bf16.mxu0 0
        %748 = vmatpush1.bf16.msra.mxu0 0
        %749 = vmatprep.subr.bf16.mxu0 0
        %750 = vmatpush1.bf16.msra.mxu0 0
        %751 = vmatprep.subr.bf16.mxu0 0
        %752 = vmatpush1.bf16.msra.mxu0 0
        %753 = vmatprep.subr.bf16.mxu0 0
        %754 = vmatpush1.bf16.msra.mxu0 0
        %755 = vmatprep.subr.bf16.mxu0 0
        %756 = vmatpush1.bf16.msra.mxu0 0
        %757 = vmatprep.subr.bf16.mxu0 0
        %758 = vmatpush1.bf16.msra.mxu0 0
        %759 = vmatprep.subr.bf16.mxu0 0
        %760 = vmatpush1.bf16.msra.mxu0 0
        %761 = vmatprep.mubr.bf16.mxu0 0
        %762 = vmatmul.mubr.bf16.gmra.mrb[0].mxu0 %v311
        %v763 = vpop.f32.mrb[0].mxu0
        %v764 = vadd.f32 0.0, %v763
        %v765 = vpop.f32.mrb[0].mxu0
        %v766 = vpop.f32.mrb[0].mxu0
        %v767 = vpop.f32.mrb[0].mxu0
        %768 = vdwg.mxu0
        %v773 = vunpack.c.l.b16 %v285
        %v774 = vunpack.c.l.b16 %v286
        %v775 = vunpack.c.l.b16 %v287
        %v776 = vunpack.c.l.b16 %v288
        %v777 = vpack.c.b16 %v774, %v773
        %v778 = vpack.c.b16 %v776, %v775
        %781 = vmatprep.subr.bf16.mxu0 0
        %782 = vmatpush1.bf16.msra.mxu0 %v777
        %783 = vmatprep.subr.bf16.mxu0 0
        %784 = vmatpush1.bf16.msra.mxu0 %v778
        %785 = vmatprep.subr.bf16.mxu0 0
        %786 = vmatpush1.bf16.msra.mxu0 0
        %787 = vmatprep.subr.bf16.mxu0 0
        %788 = vmatpush1.bf16.msra.mxu0 0
        %789 = vmatprep.subr.bf16.mxu0 0
        %790 = vmatpush1.bf16.msra.mxu0 0
        %791 = vmatprep.subr.bf16.mxu0 0
        %792 = vmatpush1.bf16.msra.mxu0 0
        %793 = vmatprep.subr.bf16.mxu0 0
        %794 = vmatpush1.bf16.msra.mxu0 0
        %795 = vmatprep.subr.bf16.mxu0 0
        %796 = vmatpush1.bf16.msra.mxu0 0
        %797 = vmatprep.subr.bf16.mxu0 0
        %798 = vmatpush1.bf16.msra.mxu0 0
        %799 = vmatprep.subr.bf16.mxu0 0
        %800 = vmatpush1.bf16.msra.mxu0 0
        %801 = vmatprep.subr.bf16.mxu0 0
        %802 = vmatpush1.bf16.msra.mxu0 0
        %803 = vmatprep.subr.bf16.mxu0 0
        %804 = vmatpush1.bf16.msra.mxu0 0
        %805 = vmatprep.subr.bf16.mxu0 0
        %806 = vmatpush1.bf16.msra.mxu0 0
        %807 = vmatprep.subr.bf16.mxu0 0
        %808 = vmatpush1.bf16.msra.mxu0 0
        %809 = vmatprep.subr.bf16.mxu0 0
        %810 = vmatpush1.bf16.msra.mxu0 0
        %811 = vmatprep.subr.bf16.mxu0 0
        %812 = vmatpush1.bf16.msra.mxu0 0
        %813 = vmatprep.mubr.bf16.mxu0 0
        %814 = vmatmul.mubr.bf16.gmra.mrb[0].mxu0 %v311
        %v815 = vpop.f32.mrb[0].mxu0
        %v816 = vadd.f32 0.0, %v815
        %v817 = vpop.f32.mrb[0].mxu0
        %v818 = vpop.f32.mrb[0].mxu0
        %v819 = vpop.f32.mrb[0].mxu0
        %820 = vdwg.mxu0
        %v825 = vunpack.c.l.b16 %v289
        %v826 = vunpack.c.l.b16 %v290
        %v827 = vunpack.c.l.b16 %v291
        %v828 = vunpack.c.l.b16 %v292
        %v829 = vpack.c.b16 %v826, %v825
        %v830 = vpack.c.b16 %v828, %v827
        %833 = vmatprep.subr.bf16.mxu0 0
        %834 = vmatpush1.bf16.msra.mxu0 %v829
        %835 = vmatprep.subr.bf16.mxu0 0
        %836 = vmatpush1.bf16.msra.mxu0 %v830
        %837 = vmatprep.subr.bf16.mxu0 0
        %838 = vmatpush1.bf16.msra.mxu0 0
        %839 = vmatprep.subr.bf16.mxu0 0
        %840 = vmatpush1.bf16.msra.mxu0 0
        %841 = vmatprep.subr.bf16.mxu0 0
        %842 = vmatpush1.bf16.msra.mxu0 0
        %843 = vmatprep.subr.bf16.mxu0 0
        %844 = vmatpush1.bf16.msra.mxu0 0
        %845 = vmatprep.subr.bf16.mxu0 0
        %846 = vmatpush1.bf16.msra.mxu0 0
        %847 = vmatprep.subr.bf16.mxu0 0
        %848 = vmatpush1.bf16.msra.mxu0 0
        %849 = vmatprep.subr.bf16.mxu0 0
        %850 = vmatpush1.bf16.msra.mxu0 0
        %851 = vmatprep.subr.bf16.mxu0 0
        %852 = vmatpush1.bf16.msra.mxu0 0
        %853 = vmatprep.subr.bf16.mxu0 0
        %854 = vmatpush1.bf16.msra.mxu0 0
        %855 = vmatprep.subr.bf16.mxu0 0
        %856 = vmatpush1.bf16.msra.mxu0 0
        %857 = vmatprep.subr.bf16.mxu0 0
        %858 = vmatpush1.bf16.msra.mxu0 0
        %859 = vmatprep.subr.bf16.mxu0 0
        %860 = vmatpush1.bf16.msra.mxu0 0
        %861 = vmatprep.subr.bf16.mxu0 0
        %862 = vmatpush1.bf16.msra.mxu0 0
        %863 = vmatprep.subr.bf16.mxu0 0
        %864 = vmatpush1.bf16.msra.mxu0 0
        %865 = vmatprep.mubr.bf16.mxu0 0
        %866 = vmatmul.mubr.bf16.gmra.mrb[0].mxu0 %v311
        %v867 = vpop.f32.mrb[0].mxu0
        %v868 = vadd.f32 0.0, %v867
        %v869 = vpop.f32.mrb[0].mxu0
        %v870 = vpop.f32.mrb[0].mxu0
        %v871 = vpop.f32.mrb[0].mxu0
        %872 = vdwg.mxu0
        %v877 = vunpack.c.l.b16 %v293
        %v878 = vunpack.c.l.b16 %v294
        %v879 = vunpack.c.l.b16 %v295
        %v880 = vunpack.c.l.b16 %v296
        %v881 = vpack.c.b16 %v878, %v877
        %v882 = vpack.c.b16 %v880, %v879
        %885 = vmatprep.subr.bf16.mxu0 0
        %886 = vmatpush1.bf16.msra.mxu0 %v881
        %887 = vmatprep.subr.bf16.mxu0 0
        %888 = vmatpush1.bf16.msra.mxu0 %v882
        %889 = vmatprep.subr.bf16.mxu0 0
        %890 = vmatpush1.bf16.msra.mxu0 0
        %891 = vmatprep.subr.bf16.mxu0 0
        %892 = vmatpush1.bf16.msra.mxu0 0
        %893 = vmatprep.subr.bf16.mxu0 0
        %894 = vmatpush1.bf16.msra.mxu0 0
        %895 = vmatprep.subr.bf16.mxu0 0
        %896 = vmatpush1.bf16.msra.mxu0 0
        %897 = vmatprep.subr.bf16.mxu0 0
        %898 = vmatpush1.bf16.msra.mxu0 0
        %899 = vmatprep.subr.bf16.mxu0 0
        %900 = vmatpush1.bf16.msra.mxu0 0
        %901 = vmatprep.subr.bf16.mxu0 0
        %902 = vmatpush1.bf16.msra.mxu0 0
        %903 = vmatprep.subr.bf16.mxu0 0
        %904 = vmatpush1.bf16.msra.mxu0 0
        %905 = vmatprep.subr.bf16.mxu0 0
        %906 = vmatpush1.bf16.msra.mxu0 0
        %907 = vmatprep.subr.bf16.mxu0 0
        %908 = vmatpush1.bf16.msra.mxu0 0
        %909 = vmatprep.subr.bf16.mxu0 0
        %910 = vmatpush1.bf16.msra.mxu0 0
        %911 = vmatprep.subr.bf16.mxu0 0
        %912 = vmatpush1.bf16.msra.mxu0 0
        %913 = vmatprep.subr.bf16.mxu0 0
        %914 = vmatpush1.bf16.msra.mxu0 0
        %915 = vmatprep.subr.bf16.mxu0 0
        %916 = vmatpush1.bf16.msra.mxu0 0
        %917 = vmatprep.mubr.bf16.mxu0 0
        %918 = vmatmul.mubr.bf16.gmra.mrb[0].mxu0 %v311
        %v919 = vpop.f32.mrb[0].mxu0
        %v920 = vadd.f32 0.0, %v919
        %v921 = vpop.f32.mrb[0].mxu0
        %v922 = vpop.f32.mrb[0].mxu0
        %v923 = vpop.f32.mrb[0].mxu0
        %924 = vdwg.mxu0
        %v925 = vpack.c.bf16 %v348, %v348
        %v926 = vpack.c.bf16 %v400, %v400
        %v927 = vpack.c.bf16 %v452, %v452
        %v928 = vpack.c.bf16 %v504, %v504
        %v929 = vpack.c.bf16 %v556, %v556
        %v930 = vpack.c.bf16 %v608, %v608
        %v931 = vpack.c.bf16 %v660, %v660
        %v932 = vpack.c.bf16 %v712, %v712
        %v933 = vpack.c.bf16 %v764, %v764
        %v934 = vpack.c.bf16 %v816, %v816
        %v935 = vpack.c.bf16 %v868, %v868
        %v936 = vpack.c.bf16 %v920, %v920
        %vm937 = vcmask 64512
        %v939 = vsel %vm937, %v925, 0
        %v942 = vsel %vm937, %v929, 0
        %944 = vmatprep.subr.bf16.mxu0 0
        %945 = vmatpush1.bf16.xpose.msra.mxu0 %v942
        %946 = vmatprep.subr.bf16.mxu0 0
        %947 = vmatpush1.bf16.xpose.msra.mxu0 0
        %948 = vmatprep.subr.bf16.mxu0 0
        %949 = vmatpush1.bf16.xpose.msra.mxu0 0
        %950 = vmatprep.subr.bf16.mxu0 0
        %951 = vmatpush1.bf16.xpose.msra.mxu0 0
        %952 = vmatprep.subr.bf16.mxu0 0
        %953 = vmatpush1.bf16.xpose.msra.mxu0 0
        %954 = vmatprep.subr.bf16.mxu0 0
        %955 = vmatpush1.bf16.xpose.msra.mxu0 0
        %956 = vmatprep.subr.bf16.mxu0 0
        %957 = vmatpush1.bf16.xpose.msra.mxu0 0
        %958 = vmatprep.subr.bf16.mxu0 0
        %959 = vmatpush1.bf16.xpose.msra.mxu0 0
        %960 = vmatprep.subr.bf16.mxu0 0
        %961 = vmatpush1.bf16.xpose.msra.mxu0 0
        %962 = vmatprep.subr.bf16.mxu0 0
        %963 = vmatpush1.bf16.xpose.msra.mxu0 0
        %964 = vmatprep.subr.bf16.mxu0 0
        %965 = vmatpush1.bf16.xpose.msra.mxu0 0
        %966 = vmatprep.subr.bf16.mxu0 0
        %967 = vmatpush1.bf16.xpose.msra.mxu0 0
        %968 = vmatprep.subr.bf16.mxu0 0
        %969 = vmatpush1.bf16.xpose.msra.mxu0 0
        %970 = vmatprep.subr.bf16.mxu0 0
        %971 = vmatpush1.bf16.xpose.msra.mxu0 0
        %972 = vmatprep.subr.bf16.mxu0 0
        %973 = vmatpush1.bf16.xpose.msra.mxu0 0
        %974 = vmatprep.subr.bf16.mxu0 0
        %975 = vmatpush1.bf16.xpose.msra.mxu0 0
        %976 = vmatprep.mubr.bf16.mxu0 0
        %977 = vmatmul.mubr.bf16.gmra.mrb[0].mxu0 %v939
        %v978 = vpop.f32.mrb[0].mxu0
        %v979 = vadd.f32 0.0, %v978
        %v980 = vpop.f32.mrb[0].mxu0
        %v981 = vpop.f32.mrb[0].mxu0
        %v982 = vpop.f32.mrb[0].mxu0
        %983 = vdwg.mxu0
        %v985 = vsel %vm937, %v926, 0
        %v988 = vsel %vm937, %v930, 0
        %990 = vmatprep.subr.bf16.mxu0 0
        %991 = vmatpush1.bf16.xpose.msra.mxu0 %v988
        %992 = vmatprep.subr.bf16.mxu0 0
        %993 = vmatpush1.bf16.xpose.msra.mxu0 0
        %994 = vmatprep.subr.bf16.mxu0 0
        %995 = vmatpush1.bf16.xpose.msra.mxu0 0
        %996 = vmatprep.subr.bf16.mxu0 0
        %997 = vmatpush1.bf16.xpose.msra.mxu0 0
        %998 = vmatprep.subr.bf16.mxu0 0
        %999 = vmatpush1.bf16.xpose.msra.mxu0 0
        %1000 = vmatprep.subr.bf16.mxu0 0
        %1001 = vmatpush1.bf16.xpose.msra.mxu0 0
        %1002 = vmatprep.subr.bf16.mxu0 0
        %1003 = vmatpush1.bf16.xpose.msra.mxu0 0
        %1004 = vmatprep.subr.bf16.mxu0 0
        %1005 = vmatpush1.bf16.xpose.msra.mxu0 0
        %1006 = vmatprep.subr.bf16.mxu0 0
        %1007 = vmatpush1.bf16.xpose.msra.mxu0 0
        %1008 = vmatprep.subr.bf16.mxu0 0
        %1009 = vmatpush1.bf16.xpose.msra.mxu0 0
        %1010 = vmatprep.subr.bf16.mxu0 0
        %1011 = vmatpush1.bf16.xpose.msra.mxu0 0
        %1012 = vmatprep.subr.bf16.mxu0 0
        %1013 = vmatpush1.bf16.xpose.msra.mxu0 0
        %1014 = vmatprep.subr.bf16.mxu0 0
        %1015 = vmatpush1.bf16.xpose.msra.mxu0 0
        %1016 = vmatprep.subr.bf16.mxu0 0
        %1017 = vmatpush1.bf16.xpose.msra.mxu0 0
        %1018 = vmatprep.subr.bf16.mxu0 0
        %1019 = vmatpush1.bf16.xpose.msra.mxu0 0
        %1020 = vmatprep.subr.bf16.mxu0 0
        %1021 = vmatpush1.bf16.xpose.msra.mxu0 0
        %1022 = vmatprep.mubr.bf16.mxu0 0
        %1023 = vmatmul.mubr.bf16.gmra.mrb[0].mxu0 %v985
        %v1024 = vpop.f32.mrb[0].mxu0
        %v1025 = vadd.f32 0.0, %v1024
        %v1026 = vpop.f32.mrb[0].mxu0
        %v1027 = vpop.f32.mrb[0].mxu0
        %v1028 = vpop.f32.mrb[0].mxu0
        %1029 = vdwg.mxu0
        %v1031 = vsel %vm937, %v927, 0
        %v1034 = vsel %vm937, %v931, 0
        %1036 = vmatprep.subr.bf16.mxu0 0
        %1037 = vmatpush1.bf16.xpose.msra.mxu0 %v1034
        %1038 = vmatprep.subr.bf16.mxu0 0
        %1039 = vmatpush1.bf16.xpose.msra.mxu0 0
        %1040 = vmatprep.subr.bf16.mxu0 0
        %1041 = vmatpush1.bf16.xpose.msra.mxu0 0
        %1042 = vmatprep.subr.bf16.mxu0 0
        %1043 = vmatpush1.bf16.xpose.msra.mxu0 0
        %1044 = vmatprep.subr.bf16.mxu0 0
        %1045 = vmatpush1.bf16.xpose.msra.mxu0 0
        %1046 = vmatprep.subr.bf16.mxu0 0
        %1047 = vmatpush1.bf16.xpose.msra.mxu0 0
        %1048 = vmatprep.subr.bf16.mxu0 0
        %1049 = vmatpush1.bf16.xpose.msra.mxu0 0
        %1050 = vmatprep.subr.bf16.mxu0 0
        %1051 = vmatpush1.bf16.xpose.msra.mxu0 0
        %1052 = vmatprep.subr.bf16.mxu0 0
        %1053 = vmatpush1.bf16.xpose.msra.mxu0 0
        %1054 = vmatprep.subr.bf16.mxu0 0
        %1055 = vmatpush1.bf16.xpose.msra.mxu0 0
        %1056 = vmatprep.subr.bf16.mxu0 0
        %1057 = vmatpush1.bf16.xpose.msra.mxu0 0
        %1058 = vmatprep.subr.bf16.mxu0 0
        %1059 = vmatpush1.bf16.xpose.msra.mxu0 0
        %1060 = vmatprep.subr.bf16.mxu0 0
        %1061 = vmatpush1.bf16.xpose.msra.mxu0 0
        %1062 = vmatprep.subr.bf16.mxu0 0
        %1063 = vmatpush1.bf16.xpose.msra.mxu0 0
        %1064 = vmatprep.subr.bf16.mxu0 0
        %1065 = vmatpush1.bf16.xpose.msra.mxu0 0
        %1066 = vmatprep.subr.bf16.mxu0 0
        %1067 = vmatpush1.bf16.xpose.msra.mxu0 0
        %1068 = vmatprep.mubr.bf16.mxu0 0
        %1069 = vmatmul.mubr.bf16.gmra.mrb[0].mxu0 %v1031
        %v1070 = vpop.f32.mrb[0].mxu0
        %v1071 = vadd.f32 0.0, %v1070
        %v1072 = vpop.f32.mrb[0].mxu0
        %v1073 = vpop.f32.mrb[0].mxu0
        %v1074 = vpop.f32.mrb[0].mxu0
        %1075 = vdwg.mxu0
        %v1077 = vsel %vm937, %v928, 0
        %v1080 = vsel %vm937, %v932, 0
        %1082 = vmatprep.subr.bf16.mxu0 0
        %1083 = vmatpush1.bf16.xpose.msra.mxu0 %v1080
        %1084 = vmatprep.subr.bf16.mxu0 0
        %1085 = vmatpush1.bf16.xpose.msra.mxu0 0
        %1086 = vmatprep.subr.bf16.mxu0 0
        %1087 = vmatpush1.bf16.xpose.msra.mxu0 0
        %1088 = vmatprep.subr.bf16.mxu0 0
        %1089 = vmatpush1.bf16.xpose.msra.mxu0 0
        %1090 = vmatprep.subr.bf16.mxu0 0
        %1091 = vmatpush1.bf16.xpose.msra.mxu0 0
        %1092 = vmatprep.subr.bf16.mxu0 0
        %1093 = vmatpush1.bf16.xpose.msra.mxu0 0
        %1094 = vmatprep.subr.bf16.mxu0 0
        %1095 = vmatpush1.bf16.xpose.msra.mxu0 0
        %1096 = vmatprep.subr.bf16.mxu0 0
        %1097 = vmatpush1.bf16.xpose.msra.mxu0 0
        %1098 = vmatprep.subr.bf16.mxu0 0
        %1099 = vmatpush1.bf16.xpose.msra.mxu0 0
        %1100 = vmatprep.subr.bf16.mxu0 0
        %1101 = vmatpush1.bf16.xpose.msra.mxu0 0
        %1102 = vmatprep.subr.bf16.mxu0 0
        %1103 = vmatpush1.bf16.xpose.msra.mxu0 0
        %1104 = vmatprep.subr.bf16.mxu0 0
        %1105 = vmatpush1.bf16.xpose.msra.mxu0 0
        %1106 = vmatprep.subr.bf16.mxu0 0
        %1107 = vmatpush1.bf16.xpose.msra.mxu0 0
        %1108 = vmatprep.subr.bf16.mxu0 0
        %1109 = vmatpush1.bf16.xpose.msra.mxu0 0
        %1110 = vmatprep.subr.bf16.mxu0 0
        %1111 = vmatpush1.bf16.xpose.msra.mxu0 0
        %1112 = vmatprep.subr.bf16.mxu0 0
        %1113 = vmatpush1.bf16.xpose.msra.mxu0 0
        %1114 = vmatprep.mubr.bf16.mxu0 0
        %1115 = vmatmul.mubr.bf16.gmra.mrb[0].mxu0 %v1077
        %v1116 = vpop.f32.mrb[0].mxu0
        %v1117 = vadd.f32 0.0, %v1116
        %v1118 = vpop.f32.mrb[0].mxu0
        %v1119 = vpop.f32.mrb[0].mxu0
        %v1120 = vpop.f32.mrb[0].mxu0
        %1121 = vdwg.mxu0
        %v1122 = vsel %vm937, %v979, -inf
        %1123 = vmax.xlane.f32.xlu0 %v1122
        %v1124 = vpop.xlane.xlu0 %1123
        %v1125 = vsel %vm937, %v1025, -inf
        %1126 = vmax.xlane.f32.xlu0 %v1125
        %v1127 = vpop.xlane.xlu0 %1126
        %v1128 = vsel %vm937, %v1071, -inf
        %1129 = vmax.xlane.f32.xlu0 %v1128
        %v1130 = vpop.xlane.xlu0 %1129
        %v1131 = vsel %vm937, %v1117, -inf
        %1132 = vmax.xlane.f32.xlu0 %v1131
        %v1133 = vpop.xlane.xlu0 %1132
        %v1134 = vsub.f32 %v979, %v1124
        %v1135 = vsub.f32 %v1025, %v1127
        %v1136 = vsub.f32 %v1071, %v1130
        %v1137 = vsub.f32 %v1117, %v1133
        %v1138 = vmul.f32 %v1134, 1.442695
        %v1139 = vpow.pop %v1138
        %v1140 = vmul.f32 %v1135, 1.442695
        %v1141 = vpow.pop %v1140
        %v1142 = vmul.f32 %v1136, 1.442695
        %v1143 = vpow.pop %v1142
        %v1144 = vmul.f32 %v1137, 1.442695
        %v1145 = vpow.pop %v1144
        %v1146 = vsel %vm937, %v1139, 0.0
        %1147 = vadd.xlane.f32.xlu0 %v1146
        %v1148 = vpop.xlane.xlu0 %1147
        %v1149 = vsel %vm937, %v1141, 0.0
        %1150 = vadd.xlane.f32.xlu0 %v1149
        %v1151 = vpop.xlane.xlu0 %1150
        %v1152 = vsel %vm937, %v1143, 0.0
        %1153 = vadd.xlane.f32.xlu0 %v1152
        %v1154 = vpop.xlane.xlu0 %1153
        %v1155 = vsel %vm937, %v1145, 0.0
        %1156 = vadd.xlane.f32.xlu0 %v1155
        %v1157 = vpop.xlane.xlu0 %1156
        %v1158 = vrcp.pop %v1148
        %v1159 = vrcp.pop %v1151
        %v1160 = vrcp.pop %v1154
        %v1161 = vrcp.pop %v1157
        %v1162 = vmul.f32 %v1139, %v1158
        %v1163 = vmul.f32 %v1141, %v1159
        %v1164 = vmul.f32 %v1143, %v1160
        %v1165 = vmul.f32 %v1145, %v1161
        %v1166 = vpack.c.bf16 %v1162, %v1162
        %v1167 = vpack.c.bf16 %v1163, %v1163
        %v1168 = vpack.c.bf16 %v1164, %v1164
        %v1169 = vpack.c.bf16 %v1165, %v1165
        %v1171 = vsel %vm937, %v1166, 0
        %vm1173 = vcmask 1043456
        %v1175 = vsel %vm1173, %v933, 0
        %1177 = vmatprep.subr.bf16.mxu0 0
        %1178 = vmatpush1.bf16.msra.mxu0 %v1175
        %1179 = vmatprep.subr.bf16.mxu0 0
        %1180 = vmatpush1.bf16.msra.mxu0 0
        %1181 = vmatprep.subr.bf16.mxu0 0
        %1182 = vmatpush1.bf16.msra.mxu0 0
        %1183 = vmatprep.subr.bf16.mxu0 0
        %1184 = vmatpush1.bf16.msra.mxu0 0
        %1185 = vmatprep.subr.bf16.mxu0 0
        %1186 = vmatpush1.bf16.msra.mxu0 0
        %1187 = vmatprep.subr.bf16.mxu0 0
        %1188 = vmatpush1.bf16.msra.mxu0 0
        %1189 = vmatprep.subr.bf16.mxu0 0
        %1190 = vmatpush1.bf16.msra.mxu0 0
        %1191 = vmatprep.subr.bf16.mxu0 0
        %1192 = vmatpush1.bf16.msra.mxu0 0
        %1193 = vmatprep.subr.bf16.mxu0 0
        %1194 = vmatpush1.bf16.msra.mxu0 0
        %1195 = vmatprep.subr.bf16.mxu0 0
        %1196 = vmatpush1.bf16.msra.mxu0 0
        %1197 = vmatprep.subr.bf16.mxu0 0
        %1198 = vmatpush1.bf16.msra.mxu0 0
        %1199 = vmatprep.subr.bf16.mxu0 0
        %1200 = vmatpush1.bf16.msra.mxu0 0
        %1201 = vmatprep.subr.bf16.mxu0 0
        %1202 = vmatpush1.bf16.msra.mxu0 0
        %1203 = vmatprep.subr.bf16.mxu0 0
        %1204 = vmatpush1.bf16.msra.mxu0 0
        %1205 = vmatprep.subr.bf16.mxu0 0
        %1206 = vmatpush1.bf16.msra.mxu0 0
        %1207 = vmatprep.subr.bf16.mxu0 0
        %1208 = vmatpush1.bf16.msra.mxu0 0
        %1209 = vmatprep.mubr.bf16.mxu0 0
        %1210 = vmatmul.mubr.bf16.gmra.mrb[0].mxu0 %v1171
        %v1211 = vpop.f32.mrb[0].mxu0
        %v1212 = vadd.f32 0.0, %v1211
        %v1213 = vpop.f32.mrb[0].mxu0
        %v1214 = vpop.f32.mrb[0].mxu0
        %v1215 = vpop.f32.mrb[0].mxu0
        %1216 = vdwg.mxu0
        %v1218 = vsel %vm937, %v1167, 0
        %v1221 = vsel %vm1173, %v934, 0
        %1223 = vmatprep.subr.bf16.mxu0 0
        %1224 = vmatpush1.bf16.msra.mxu0 %v1221
        %1225 = vmatprep.subr.bf16.mxu0 0
        %1226 = vmatpush1.bf16.msra.mxu0 0
        %1227 = vmatprep.subr.bf16.mxu0 0
        %1228 = vmatpush1.bf16.msra.mxu0 0
        %1229 = vmatprep.subr.bf16.mxu0 0
        %1230 = vmatpush1.bf16.msra.mxu0 0
        %1231 = vmatprep.subr.bf16.mxu0 0
        %1232 = vmatpush1.bf16.msra.mxu0 0
        %1233 = vmatprep.subr.bf16.mxu0 0
        %1234 = vmatpush1.bf16.msra.mxu0 0
        %1235 = vmatprep.subr.bf16.mxu0 0
        %1236 = vmatpush1.bf16.msra.mxu0 0
        %1237 = vmatprep.subr.bf16.mxu0 0
        %1238 = vmatpush1.bf16.msra.mxu0 0
        %1239 = vmatprep.subr.bf16.mxu0 0
        %1240 = vmatpush1.bf16.msra.mxu0 0
        %1241 = vmatprep.subr.bf16.mxu0 0
        %1242 = vmatpush1.bf16.msra.mxu0 0
        %1243 = vmatprep.subr.bf16.mxu0 0
        %1244 = vmatpush1.bf16.msra.mxu0 0
        %1245 = vmatprep.subr.bf16.mxu0 0
        %1246 = vmatpush1.bf16.msra.mxu0 0
        %1247 = vmatprep.subr.bf16.mxu0 0
        %1248 = vmatpush1.bf16.msra.mxu0 0
        %1249 = vmatprep.subr.bf16.mxu0 0
        %1250 = vmatpush1.bf16.msra.mxu0 0
        %1251 = vmatprep.subr.bf16.mxu0 0
        %1252 = vmatpush1.bf16.msra.mxu0 0
        %1253 = vmatprep.subr.bf16.mxu0 0
        %1254 = vmatpush1.bf16.msra.mxu0 0
        %1255 = vmatprep.mubr.bf16.mxu0 0
        %1256 = vmatmul.mubr.bf16.gmra.mrb[0].mxu0 %v1218
        %v1257 = vpop.f32.mrb[0].mxu0
        %v1258 = vadd.f32 0.0, %v1257
        %v1259 = vpop.f32.mrb[0].mxu0
        %v1260 = vpop.f32.mrb[0].mxu0
        %v1261 = vpop.f32.mrb[0].mxu0
        %1262 = vdwg.mxu0
        %v1264 = vsel %vm937, %v1168, 0
        %v1267 = vsel %vm1173, %v935, 0
        %1269 = vmatprep.subr.bf16.mxu0 0
        %1270 = vmatpush1.bf16.msra.mxu0 %v1267
        %1271 = vmatprep.subr.bf16.mxu0 0
        %1272 = vmatpush1.bf16.msra.mxu0 0
        %1273 = vmatprep.subr.bf16.mxu0 0
        %1274 = vmatpush1.bf16.msra.mxu0 0
        %1275 = vmatprep.subr.bf16.mxu0 0
        %1276 = vmatpush1.bf16.msra.mxu0 0
        %1277 = vmatprep.subr.bf16.mxu0 0
        %1278 = vmatpush1.bf16.msra.mxu0 0
        %1279 = vmatprep.subr.bf16.mxu0 0
        %1280 = vmatpush1.bf16.msra.mxu0 0
        %1281 = vmatprep.subr.bf16.mxu0 0
        %1282 = vmatpush1.bf16.msra.mxu0 0
        %1283 = vmatprep.subr.bf16.mxu0 0
        %1284 = vmatpush1.bf16.msra.mxu0 0
        %1285 = vmatprep.subr.bf16.mxu0 0
        %1286 = vmatpush1.bf16.msra.mxu0 0
        %1287 = vmatprep.subr.bf16.mxu0 0
        %1288 = vmatpush1.bf16.msra.mxu0 0
        %1289 = vmatprep.subr.bf16.mxu0 0
        %1290 = vmatpush1.bf16.msra.mxu0 0
        %1291 = vmatprep.subr.bf16.mxu0 0
        %1292 = vmatpush1.bf16.msra.mxu0 0
        %1293 = vmatprep.subr.bf16.mxu0 0
        %1294 = vmatpush1.bf16.msra.mxu0 0
        %1295 = vmatprep.subr.bf16.mxu0 0
        %1296 = vmatpush1.bf16.msra.mxu0 0
        %1297 = vmatprep.subr.bf16.mxu0 0
        %1298 = vmatpush1.bf16.msra.mxu0 0
        %1299 = vmatprep.subr.bf16.mxu0 0
        %1300 = vmatpush1.bf16.msra.mxu0 0
        %1301 = vmatprep.mubr.bf16.mxu0 0
        %1302 = vmatmul.mubr.bf16.gmra.mrb[0].mxu0 %v1264
        %v1303 = vpop.f32.mrb[0].mxu0
        %v1304 = vadd.f32 0.0, %v1303
        %v1305 = vpop.f32.mrb[0].mxu0
        %v1306 = vpop.f32.mrb[0].mxu0
        %v1307 = vpop.f32.mrb[0].mxu0
        %1308 = vdwg.mxu0
        %v1310 = vsel %vm937, %v1169, 0
        %v1313 = vsel %vm1173, %v936, 0
        %1315 = vmatprep.subr.bf16.mxu0 0
        %1316 = vmatpush1.bf16.msra.mxu0 %v1313
        %1317 = vmatprep.subr.bf16.mxu0 0
        %1318 = vmatpush1.bf16.msra.mxu0 0
        %1319 = vmatprep.subr.bf16.mxu0 0
        %1320 = vmatpush1.bf16.msra.mxu0 0
        %1321 = vmatprep.subr.bf16.mxu0 0
        %1322 = vmatpush1.bf16.msra.mxu0 0
        %1323 = vmatprep.subr.bf16.mxu0 0
        %1324 = vmatpush1.bf16.msra.mxu0 0
        %1325 = vmatprep.subr.bf16.mxu0 0
        %1326 = vmatpush1.bf16.msra.mxu0 0
        %1327 = vmatprep.subr.bf16.mxu0 0
        %1328 = vmatpush1.bf16.msra.mxu0 0
        %1329 = vmatprep.subr.bf16.mxu0 0
        %1330 = vmatpush1.bf16.msra.mxu0 0
        %1331 = vmatprep.subr.bf16.mxu0 0
        %1332 = vmatpush1.bf16.msra.mxu0 0
        %1333 = vmatprep.subr.bf16.mxu0 0
        %1334 = vmatpush1.bf16.msra.mxu0 0
        %1335 = vmatprep.subr.bf16.mxu0 0
        %1336 = vmatpush1.bf16.msra.mxu0 0
        %1337 = vmatprep.subr.bf16.mxu0 0
        %1338 = vmatpush1.bf16.msra.mxu0 0
        %1339 = vmatprep.subr.bf16.mxu0 0
        %1340 = vmatpush1.bf16.msra.mxu0 0
        %1341 = vmatprep.subr.bf16.mxu0 0
        %1342 = vmatpush1.bf16.msra.mxu0 0
        %1343 = vmatprep.subr.bf16.mxu0 0
        %1344 = vmatpush1.bf16.msra.mxu0 0
        %1345 = vmatprep.subr.bf16.mxu0 0
        %1346 = vmatpush1.bf16.msra.mxu0 0
        %1347 = vmatprep.mubr.bf16.mxu0 0
        %1348 = vmatmul.mubr.bf16.gmra.mrb[0].mxu0 %v1310
        %v1349 = vpop.f32.mrb[0].mxu0
        %v1350 = vadd.f32 0.0, %v1349
        %v1351 = vpop.f32.mrb[0].mxu0
        %v1352 = vpop.f32.mrb[0].mxu0
        %v1353 = vpop.f32.mrb[0].mxu0
        %1354 = vdwg.mxu0
        %v1355 = vpack.c.bf16 %v1212, %v1212
        %v1356 = vpack.c.bf16 %v1258, %v1258
        %v1357 = vpack.c.bf16 %v1304, %v1304
        %v1358 = vpack.c.bf16 %v1350, %v1350
        %v1359 = vld [vmem:[%s2] sm:$0xff]
        %v1360 = vld [vmem:[%s2 + $0x8] sm:$0xff]
        %v1361 = vld [vmem:[%s2 + $0x10] sm:$0xff]
        %v1362 = vld [vmem:[%s2 + $0x18] sm:$0xff]
        %v1364 = vunpack.c.l.b16 %v1359
        %v1365 = vunpack.c.h.b16 %v1359
        %v1366 = vpack.c.b16 %v1364, %v1364
        %v1367 = vpack.c.b16 %v1365, %v1365
        %v1369 = vsel %vm937, %v1355, 0
        %v1372 = vsel %vm1173, %v1366, 0
        %v1375 = vsel %vm1173, %v1367, 0
        %1377 = vmatprep.subr.bf16.mxu0 %v1375
        %1378 = vmatpush1.bf16.msra.mxu0 %v1372
        %1379 = vmatprep.subr.bf16.mxu0 0
        %1380 = vmatpush1.bf16.msra.mxu0 0
        %1381 = vmatprep.subr.bf16.mxu0 0
        %1382 = vmatpush1.bf16.msra.mxu0 0
        %1383 = vmatprep.subr.bf16.mxu0 0
        %1384 = vmatpush1.bf16.msra.mxu0 0
        %1385 = vmatprep.subr.bf16.mxu0 0
        %1386 = vmatpush1.bf16.msra.mxu0 0
        %1387 = vmatprep.subr.bf16.mxu0 0
        %1388 = vmatpush1.bf16.msra.mxu0 0
        %1389 = vmatprep.subr.bf16.mxu0 0
        %1390 = vmatpush1.bf16.msra.mxu0 0
        %1391 = vmatprep.subr.bf16.mxu0 0
        %1392 = vmatpush1.bf16.msra.mxu0 0
        %1393 = vmatprep.subr.bf16.mxu0 0
        %1394 = vmatpush1.bf16.msra.mxu0 0
        %1395 = vmatprep.subr.bf16.mxu0 0
        %1396 = vmatpush1.bf16.msra.mxu0 0
        %1397 = vmatprep.subr.bf16.mxu0 0
        %1398 = vmatpush1.bf16.msra.mxu0 0
        %1399 = vmatprep.subr.bf16.mxu0 0
        %1400 = vmatpush1.bf16.msra.mxu0 0
        %1401 = vmatprep.subr.bf16.mxu0 0
        %1402 = vmatpush1.bf16.msra.mxu0 0
        %1403 = vmatprep.subr.bf16.mxu0 0
        %1404 = vmatpush1.bf16.msra.mxu0 0
        %1405 = vmatprep.subr.bf16.mxu0 0
        %1406 = vmatpush1.bf16.msra.mxu0 0
        %1407 = vmatprep.subr.bf16.mxu0 0
        %1408 = vmatpush1.bf16.msra.mxu0 0
        %1409 = vmatprep.mubr.bf16.mxu0 0
        %1410 = vmatmul.mubr.bf16.gmra.mrb[0].mxu0 %v1369
        %v1411 = vpop.f32.mrb[0].mxu0
        %v1412 = vadd.f32 0.0, %v1411
        %v1413 = vpop.f32.mrb[0].mxu0
        %v1414 = vadd.f32 0.0, %v1413
        %v1415 = vpop.f32.mrb[0].mxu0
        %v1416 = vpop.f32.mrb[0].mxu0
        %1417 = vdwg.mxu0
        %v1419 = vunpack.c.l.b16 %v1360
        %v1420 = vunpack.c.h.b16 %v1360
        %v1421 = vpack.c.b16 %v1419, %v1419
        %v1422 = vpack.c.b16 %v1420, %v1420
        %v1424 = vsel %vm937, %v1356, 0
        %v1427 = vsel %vm1173, %v1421, 0
        %v1430 = vsel %vm1173, %v1422, 0
        %1432 = vmatprep.subr.bf16.mxu0 %v1430
        %1433 = vmatpush1.bf16.msra.mxu0 %v1427
        %1434 = vmatprep.subr.bf16.mxu0 0
        %1435 = vmatpush1.bf16.msra.mxu0 0
        %1436 = vmatprep.subr.bf16.mxu0 0
        %1437 = vmatpush1.bf16.msra.mxu0 0
        %1438 = vmatprep.subr.bf16.mxu0 0
        %1439 = vmatpush1.bf16.msra.mxu0 0
        %1440 = vmatprep.subr.bf16.mxu0 0
        %1441 = vmatpush1.bf16.msra.mxu0 0
        %1442 = vmatprep.subr.bf16.mxu0 0
        %1443 = vmatpush1.bf16.msra.mxu0 0
        %1444 = vmatprep.subr.bf16.mxu0 0
        %1445 = vmatpush1.bf16.msra.mxu0 0
        %1446 = vmatprep.subr.bf16.mxu0 0
        %1447 = vmatpush1.bf16.msra.mxu0 0
        %1448 = vmatprep.subr.bf16.mxu0 0
        %1449 = vmatpush1.bf16.msra.mxu0 0
        %1450 = vmatprep.subr.bf16.mxu0 0
        %1451 = vmatpush1.bf16.msra.mxu0 0
        %1452 = vmatprep.subr.bf16.mxu0 0
        %1453 = vmatpush1.bf16.msra.mxu0 0
        %1454 = vmatprep.subr.bf16.mxu0 0
        %1455 = vmatpush1.bf16.msra.mxu0 0
        %1456 = vmatprep.subr.bf16.mxu0 0
        %1457 = vmatpush1.bf16.msra.mxu0 0
        %1458 = vmatprep.subr.bf16.mxu0 0
        %1459 = vmatpush1.bf16.msra.mxu0 0
        %1460 = vmatprep.subr.bf16.mxu0 0
        %1461 = vmatpush1.bf16.msra.mxu0 0
        %1462 = vmatprep.subr.bf16.mxu0 0
        %1463 = vmatpush1.bf16.msra.mxu0 0
        %1464 = vmatprep.mubr.bf16.mxu0 0
        %1465 = vmatmul.mubr.bf16.gmra.mrb[0].mxu0 %v1424
        %v1466 = vpop.f32.mrb[0].mxu0
        %v1467 = vadd.f32 0.0, %v1466
        %v1468 = vpop.f32.mrb[0].mxu0
        %v1469 = vadd.f32 0.0, %v1468
        %v1470 = vpop.f32.mrb[0].mxu0
        %v1471 = vpop.f32.mrb[0].mxu0
        %1472 = vdwg.mxu0
        %v1474 = vunpack.c.l.b16 %v1361
        %v1475 = vunpack.c.h.b16 %v1361
        %v1476 = vpack.c.b16 %v1474, %v1474
        %v1477 = vpack.c.b16 %v1475, %v1475
        %v1479 = vsel %vm937, %v1357, 0
        %v1482 = vsel %vm1173, %v1476, 0
        %v1485 = vsel %vm1173, %v1477, 0
        %1487 = vmatprep.subr.bf16.mxu0 %v1485
        %1488 = vmatpush1.bf16.msra.mxu0 %v1482
        %1489 = vmatprep.subr.bf16.mxu0 0
        %1490 = vmatpush1.bf16.msra.mxu0 0
        %1491 = vmatprep.subr.bf16.mxu0 0
        %1492 = vmatpush1.bf16.msra.mxu0 0
        %1493 = vmatprep.subr.bf16.mxu0 0
        %1494 = vmatpush1.bf16.msra.mxu0 0
        %1495 = vmatprep.subr.bf16.mxu0 0
        %1496 = vmatpush1.bf16.msra.mxu0 0
        %1497 = vmatprep.subr.bf16.mxu0 0
        %1498 = vmatpush1.bf16.msra.mxu0 0
        %1499 = vmatprep.subr.bf16.mxu0 0
        %1500 = vmatpush1.bf16.msra.mxu0 0
        %1501 = vmatprep.subr.bf16.mxu0 0
        %1502 = vmatpush1.bf16.msra.mxu0 0
        %1503 = vmatprep.subr.bf16.mxu0 0
        %1504 = vmatpush1.bf16.msra.mxu0 0
        %1505 = vmatprep.subr.bf16.mxu0 0
        %1506 = vmatpush1.bf16.msra.mxu0 0
        %1507 = vmatprep.subr.bf16.mxu0 0
        %1508 = vmatpush1.bf16.msra.mxu0 0
        %1509 = vmatprep.subr.bf16.mxu0 0
        %1510 = vmatpush1.bf16.msra.mxu0 0
        %1511 = vmatprep.subr.bf16.mxu0 0
        %1512 = vmatpush1.bf16.msra.mxu0 0
        %1513 = vmatprep.subr.bf16.mxu0 0
        %1514 = vmatpush1.bf16.msra.mxu0 0
        %1515 = vmatprep.subr.bf16.mxu0 0
        %1516 = vmatpush1.bf16.msra.mxu0 0
        %1517 = vmatprep.subr.bf16.mxu0 0
        %1518 = vmatpush1.bf16.msra.mxu0 0
        %1519 = vmatprep.mubr.bf16.mxu0 0
        %1520 = vmatmul.mubr.bf16.gmra.mrb[0].mxu0 %v1479
        %v1521 = vpop.f32.mrb[0].mxu0
        %v1522 = vadd.f32 0.0, %v1521
        %v1523 = vpop.f32.mrb[0].mxu0
        %v1524 = vadd.f32 0.0, %v1523
        %v1525 = vpop.f32.mrb[0].mxu0
        %v1526 = vpop.f32.mrb[0].mxu0
        %1527 = vdwg.mxu0
        %v1529 = vunpack.c.l.b16 %v1362
        %v1530 = vunpack.c.h.b16 %v1362
        %v1531 = vpack.c.b16 %v1529, %v1529
        %v1532 = vpack.c.b16 %v1530, %v1530
        %v1534 = vsel %vm937, %v1358, 0
        %v1537 = vsel %vm1173, %v1531, 0
        %v1540 = vsel %vm1173, %v1532, 0
        %1542 = vmatprep.subr.bf16.mxu0 %v1540
        %1543 = vmatpush1.bf16.msra.mxu0 %v1537
        %1544 = vmatprep.subr.bf16.mxu0 0
        %1545 = vmatpush1.bf16.msra.mxu0 0
        %1546 = vmatprep.subr.bf16.mxu0 0
        %1547 = vmatpush1.bf16.msra.mxu0 0
        %1548 = vmatprep.subr.bf16.mxu0 0
        %1549 = vmatpush1.bf16.msra.mxu0 0
        %1550 = vmatprep.subr.bf16.mxu0 0
        %1551 = vmatpush1.bf16.msra.mxu0 0
        %1552 = vmatprep.subr.bf16.mxu0 0
        %1553 = vmatpush1.bf16.msra.mxu0 0
        %1554 = vmatprep.subr.bf16.mxu0 0
        %1555 = vmatpush1.bf16.msra.mxu0 0
        %1556 = vmatprep.subr.bf16.mxu0 0
        %1557 = vmatpush1.bf16.msra.mxu0 0
        %1558 = vmatprep.subr.bf16.mxu0 0
        %1559 = vmatpush1.bf16.msra.mxu0 0
        %1560 = vmatprep.subr.bf16.mxu0 0
        %1561 = vmatpush1.bf16.msra.mxu0 0
        %1562 = vmatprep.subr.bf16.mxu0 0
        %1563 = vmatpush1.bf16.msra.mxu0 0
        %1564 = vmatprep.subr.bf16.mxu0 0
        %1565 = vmatpush1.bf16.msra.mxu0 0
        %1566 = vmatprep.subr.bf16.mxu0 0
        %1567 = vmatpush1.bf16.msra.mxu0 0
        %1568 = vmatprep.subr.bf16.mxu0 0
        %1569 = vmatpush1.bf16.msra.mxu0 0
        %1570 = vmatprep.subr.bf16.mxu0 0
        %1571 = vmatpush1.bf16.msra.mxu0 0
        %1572 = vmatprep.subr.bf16.mxu0 0
        %1573 = vmatpush1.bf16.msra.mxu0 0
        %1574 = vmatprep.mubr.bf16.mxu0 0
        %1575 = vmatmul.mubr.bf16.gmra.mrb[0].mxu0 %v1534
        %v1576 = vpop.f32.mrb[0].mxu0
        %v1577 = vadd.f32 0.0, %v1576
        %v1578 = vpop.f32.mrb[0].mxu0
        %v1579 = vadd.f32 0.0, %v1578
        %v1580 = vpop.f32.mrb[0].mxu0
        %v1581 = vpop.f32.mrb[0].mxu0
        %1582 = vdwg.mxu0
        %v1583 = vld [vmem:[%s3] sm:$0xff]
        %v1584 = vld [vmem:[%s3 + $0x8] sm:$0xff]
        %v1585 = vld [vmem:[%s3 + $0x10] sm:$0xff]
        %v1586 = vld [vmem:[%s3 + $0x18] sm:$0xff]
        %v1587 = vld [vmem:[%s3 + $0x20] sm:$0xff]
        %v1588 = vld [vmem:[%s3 + $0x28] sm:$0xff]
        %v1589 = vld [vmem:[%s3 + $0x30] sm:$0xff]
        %v1590 = vld [vmem:[%s3 + $0x38] sm:$0xff]
        %v1591 = vmul.f32 %v1412, %v1583
        %v1592 = vmul.f32 %v1414, %v1584
        %v1593 = vmul.f32 %v1467, %v1585
        %v1594 = vmul.f32 %v1469, %v1586
        %v1595 = vmul.f32 %v1522, %v1587
        %v1596 = vmul.f32 %v1524, %v1588
        %v1597 = vmul.f32 %v1577, %v1589
        %v1598 = vmul.f32 %v1579, %v1590
        %v1599 = vld [vmem:[%s4] sm:$0x1]
        %v1600 = vld [vmem:[%s5] sm:$0x3]
        %v1602 = vlaneseq
        %v1603 = vshrl.u32 %v1602, 7
        %v1604 = vsub.s32 0, %v1603
        %v1605 = vrot.slane %v1600, %v1604
        %v1606 = vlaneseq
        %v1607 = vshrl.u32 %v1606, 7
        %v1608 = vsub.s32 1, %v1607
        %v1609 = vrot.slane %v1600, %v1608
        %v1613 = vsel %vm309, %v1599, 0
        %1615 = vmatprep.subr.mxu0 %v1592
        %1616 = vmatpush1.msra.mxu0 %v1591
        %1617 = vmatprep.subr.mxu0 %v1594
        %1618 = vmatpush1.msra.mxu0 %v1593
        %1619 = vmatprep.subr.mxu0 %v1596
        %1620 = vmatpush1.msra.mxu0 %v1595
        %1621 = vmatprep.subr.mxu0 %v1598
        %1622 = vmatpush1.msra.mxu0 %v1597
        %1623 = vmatprep.subr.mxu0 0.0
        %1624 = vmatpush1.msra.mxu0 0.0
        %1625 = vmatprep.subr.mxu0 0.0
        %1626 = vmatpush1.msra.mxu0 0.0
        %1627 = vmatprep.subr.mxu0 0.0
        %1628 = vmatpush1.msra.mxu0 0.0
        %1629 = vmatprep.subr.mxu0 0.0
        %1630 = vmatpush1.msra.mxu0 0.0
        %1631 = vmatprep.subr.mxu0 0.0
        %1632 = vmatpush1.msra.mxu0 0.0
        %1633 = vmatprep.subr.mxu0 0.0
        %1634 = vmatpush1.msra.mxu0 0.0
        %1635 = vmatprep.subr.mxu0 0.0
        %1636 = vmatpush1.msra.mxu0 0.0
        %1637 = vmatprep.subr.mxu0 0.0
        %1638 = vmatpush1.msra.mxu0 0.0
        %1639 = vmatprep.subr.mxu0 0.0
        %1640 = vmatpush1.msra.mxu0 0.0
        %1641 = vmatprep.subr.mxu0 0.0
        %1642 = vmatpush1.msra.mxu0 0.0
        %1643 = vmatprep.subr.mxu0 0.0
        %1644 = vmatpush1.msra.mxu0 0.0
        %1645 = vmatprep.subr.mxu0 0.0
        %1646 = vmatpush1.msra.mxu0 0.0
        %1647 = vmatprep.subr.mxu0 0.0
        %1648 = vmatpush1.msra.mxu0 0.0
        %1649 = vmatprep.subr.mxu0 0.0
        %1650 = vmatpush1.msra.mxu0 0.0
        %1651 = vmatprep.subr.mxu0 0.0
        %1652 = vmatpush1.msra.mxu0 0.0
        %1653 = vmatprep.subr.mxu0 0.0
        %1654 = vmatpush1.msra.mxu0 0.0
        %1655 = vmatprep.subr.mxu0 0.0
        %1656 = vmatpush1.msra.mxu0 0.0
        %1657 = vmatprep.subr.mxu0 0.0
        %1658 = vmatpush1.msra.mxu0 0.0
        %1659 = vmatprep.subr.mxu0 0.0
        %1660 = vmatpush1.msra.mxu0 0.0
        %1661 = vmatprep.subr.mxu0 0.0
        %1662 = vmatpush1.msra.mxu0 0.0
        %1663 = vmatprep.subr.mxu0 0.0
        %1664 = vmatpush1.msra.mxu0 0.0
        %1665 = vmatprep.subr.mxu0 0.0
        %1666 = vmatpush1.msra.mxu0 0.0
        %1667 = vmatprep.subr.mxu0 0.0
        %1668 = vmatpush1.msra.mxu0 0.0
        %1669 = vmatprep.subr.mxu0 0.0
        %1670 = vmatpush1.msra.mxu0 0.0
        %1671 = vmatprep.subr.mxu0 0.0
        %1672 = vmatpush1.msra.mxu0 0.0
        %1673 = vmatprep.subr.mxu0 0.0
        %1674 = vmatpush1.msra.mxu0 0.0
        %1675 = vmatprep.subr.mxu0 0.0
        %1676 = vmatpush1.msra.mxu0 0.0
        %1677 = vmatprep.subr.mxu0 0.0
        %1678 = vmatpush1.msra.mxu0 0.0
        %1679 = vmatprep.mubr.f32.mxu0 0.0
        %1680 = vmatmul.mubr.f32.gmra.mrb[0].mxu0 %v1613
        %v1681 = vpop.f32.mrb[0].mxu0
        %v1682 = vadd.f32 %v1605, %v1681
        %v1683 = vpop.f32.mrb[0].mxu0
        %v1684 = vadd.f32 %v1609, %v1683
        %1685 = vdwg.mxu0
        %v1688 = vcombine.low %v1682, %v1684
        %v1690 = vunpack.c.l.s4 1966171168
        %v1691 = vunpack.c.0.s8 %v1690
        %v1692 = vlaneseq
        %v1693 = vshrl.u32 %v1692, 7
        %v1694 = vsub.s32 %v1691, %v1693
        %v1695 = vrot.slane %v1688, %v1694
        %v1697 = vunpack.c.l.s4 1966171168
        %v1698 = vunpack.c.0.s8 %v1697
        %v1699 = vlaneseq
        %v1700 = vshrl.u32 %v1699, 7
        %v1701 = vsub.s32 %v1698, %v1700
        %v1702 = vrot.slane %v1695, %v1701
        %v1704 = vlaneseq
        %vm1705 = vcmp.ge.s32.totalorder %v1704, 0
        %vm1706 = vcmp.lt.s32.totalorder %v1704, 256
        %vm1707 = vmand %vm1705, %vm1706
        %1708 = vst.msk [vmem:[%s242] sm:$0x3] %vm1707, %v1702
        %s1709 = sand.u32 %s159, 1
        %s1710 = scalar_lea.sflag [#allocation3], %s1709
        %s1711 = sand.u32 %s159, 1
        %s1712 = smul.addr %s1711, 2
        %s1713 = scalar_lea.vmem [#allocation2], %s1712
        // Predicated region
        $region45: #{tpu_custom_call.1} parent=43 // pred_check
          %p1714 = pneg %p169
        $region46: #{tpu_custom_call.1} parent=43 // pred_check_branch
          %1716 = sbr.rel (%p1714) target = $region48
        $region47: #{tpu_custom_call.1} parent=43 // pred_region
          %s1718 = ssub.s32 32, 32
          %1719 = vsyncadd %s1710, %s1718
          %s1720 = smul.addr %s20, 2
          %s1721 = smul.addr %s1720, 16
          %s1722 = scalar_lea.hbm %s6, %s1721
          %s1724 = sshll.u32 %s1713, 4
          %s1725 = int_to_ptr.vmem [resolvable:$true] %s1724
          %1727 = dma.vmem_to_hbm [thread:$0]  %s1725, 32, %s1722, %s1710
        $region48: #{tpu_custom_call.1} parent=43 // pred_fallthru
          _
      $region44: #{tpu_custom_call.1} parent=5 // pred_fallthru
        _
      %p1728 = scmp.le.s32.totalorder 2, %s15
      // Predicated region
      $region49: #{tpu_custom_call.1} parent=5 // pred_check
        %p1729 = pneg %p1728
      $region50: #{tpu_custom_call.1} parent=5 // pred_check_branch
        %1731 = sbr.rel (%p1729) target = $region52
      $region51: #{tpu_custom_call.1} parent=5 // pred_region
        %s1732 = ssub.s32 %s15, 2
        // Predicated region
        $region53: #{tpu_custom_call.1} parent=51 // pred_check
          %p1733 = pneg %p175
        $region54: #{tpu_custom_call.1} parent=51 // pred_check_branch
          %1735 = sbr.rel (%p1733) target = $region56
        $region55: #{tpu_custom_call.1} parent=51 // pred_region
          %s1736 = sand.u32 %s160, 1
          %s1737 = scalar_lea.sflag [#allocation3], %s1736
          %s1738 = sand.u32 %s160, 1
          %s1739 = smul.addr %s1738, 2
          %s1740 = scalar_lea.vmem [#allocation2], %s1739
          %1741 = dma.done %s1737, 32
        $region56: #{tpu_custom_call.1} parent=51 // pred_fallthru
          _
      $region52: #{tpu_custom_call.1} parent=5 // pred_fallthru
        _
    $region6: #{tpu_custom_call.1} parent=1 // loop_footer
      %s19 = sadd.s32 1, %s15
    $region7: #{tpu_custom_call.1} parent=1 // loop_footer_branch
      %14 = sbr.rel target = $region3
    $region8: #{tpu_custom_call.1} parent=1 // loop_exit
      _
    %1742 = vsyncpa [#allocation3], 1
    %s1743 = scalar_lea.sflag [#allocation3], 1
    %1744 = vsyncpa %s1743, 1

</llo_original>
